<compile_context>
chip_gen: v7x
topology: tpu7x:2x2x1
jax: 0.10.0
libtpu: 0.0.40
codegen_flags: <defaults>
</compile_context>

<pallas_src>
from functools import partial

import jax
import jax.numpy as jnp
from jax.experimental import pallas as pl
from jax.experimental.pallas import tpu as pltpu


def _round_up(n, m=128):
    return ((n + m - 1) // m) * m


def _critic_kernel(l1p,
                   sa_ref,
                   w_in_ref, b14_ref,
                   w2_ref, b2_ref, w5_ref, b5_ref,
                   w3_ref, w6_ref, bout_ref,
                   o_ref):
    """One batch tile of the twin-critic forward.

    h   = relu(sa @ W_in + b14)          # (TB, 2*l1p), both heads fused
    z1  = relu(h[:, :l1p] @ W2 + b2)     # head-1 layer 2 (padded to l2p)
    z2  = relu(h[:, l1p:] @ W5 + b5)     # head-2 layer 2 (padded to l2p)
    out = z1 @ W3 + z2 @ W6 + bout       # (TB, 128): col0 = q1, col1 = q2

    bf16 MXU operands, f32 accumulation, bias-add / ReLU in f32.
    """
    sa = sa_ref[...].astype(jnp.bfloat16)
    h = jnp.dot(sa, w_in_ref[...], preferred_element_type=jnp.float32)
    h = jnp.maximum(h + b14_ref[...], 0.0)

    # Lane-aligned head split (l1p is a multiple of 128).
    h1 = h[:, :l1p].astype(jnp.bfloat16)
    h2 = h[:, l1p:].astype(jnp.bfloat16)

    z1 = jnp.maximum(
        jnp.dot(h1, w2_ref[...], preferred_element_type=jnp.float32)
        + b2_ref[...], 0.0)
    z2 = jnp.maximum(
        jnp.dot(h2, w5_ref[...], preferred_element_type=jnp.float32)
        + b5_ref[...], 0.0)

    # Final layer: each head's weight occupies one column of a 128-wide slab,
    # so the output is a single lane-dense store.
    q = jnp.dot(z1.astype(jnp.bfloat16), w3_ref[...],
                preferred_element_type=jnp.float32)
    q = q + jnp.dot(z2.astype(jnp.bfloat16), w6_ref[...],
                    preferred_element_type=jnp.float32)
    o_ref[...] = q + bout_ref[...]


def prepare_kernel_params(params):
    """One-time re-layout of PyTorch-style params into kernel layout.

    Returns a dict of arrays (weights bf16, biases f32):
      w_in : (in_dim, 2*l1p)  fused layer-1 weight for both heads
                              (head 1 in cols [:l1], head 2 in cols [l1p:l1p+l1])
      b14  : (1, 2*l1p) f32
      w2/w5: (l1p, l2p)       per-head layer-2 weight, zero padded
      b2/b5: (1, l2p)  f32
      w3/w6: (l2p, 128)       per-head output weight in column 0 / 1
      bout : (1, 128)  f32    b3 in col 0, b6 in col 1
    """
    w1, b1 = params["critic_1.weight"], params["critic_1.bias"]
    w2, b2 = params["critic_2.weight"], params["critic_2.bias"]
    w3, b3 = params["critic_3.weight"], params["critic_3.bias"]
    w4, b4 = params["critic_4.weight"], params["critic_4.bias"]
    w5, b5 = params["critic_5.weight"], params["critic_5.bias"]
    w6, b6 = params["critic_6.weight"], params["critic_6.bias"]

    in_dim = w1.shape[1]
    l1 = w1.shape[0]
    l2 = w2.shape[0]
    l1p = _round_up(l1)
    l2p = _round_up(l2)

    w_in = jnp.zeros((in_dim, 2 * l1p), jnp.float32)
    w_in = w_in.at[:, :l1].set(w1.T.astype(jnp.float32))
    w_in = w_in.at[:, l1p:l1p + l1].set(w4.T.astype(jnp.float32))

    b14 = jnp.zeros((1, 2 * l1p), jnp.float32)
    b14 = b14.at[0, :l1].set(b1).at[0, l1p:l1p + l1].set(b4)

    w2p = jnp.zeros((l1p, l2p), jnp.float32).at[:l1, :l2].set(w2.T)
    w5p = jnp.zeros((l1p, l2p), jnp.float32).at[:l1, :l2].set(w5.T)
    b2p = jnp.zeros((1, l2p), jnp.float32).at[0, :l2].set(b2)
    b5p = jnp.zeros((1, l2p), jnp.float32).at[0, :l2].set(b5)

    w3p = jnp.zeros((l2p, 128), jnp.float32).at[:l2, 0].set(w3[0])
    w6p = jnp.zeros((l2p, 128), jnp.float32).at[:l2, 1].set(w6[0])
    bout = jnp.zeros((1, 128), jnp.float32).at[0, 0].set(b3[0]).at[0, 1].set(b6[0])

    bf16 = jnp.bfloat16
    return {
        "w_in": w_in.astype(bf16), "b14": b14,
        "w2": w2p.astype(bf16), "b2": b2p,
        "w5": w5p.astype(bf16), "b5": b5p,
        "w3": w3p.astype(bf16), "w6": w6p.astype(bf16),
        "bout": bout,
    }


def critic_forward(s, a, kparams, tile_b=None):
    """Pallas implementation of Critic_Network.forward(s, a) -> (q1, q2).

    `kparams` must come from prepare_kernel_params (called once)."""
    batch = s.shape[0]
    sa = jnp.concatenate(
        [s.astype(jnp.float32), a.astype(jnp.float32)], axis=1)
    in_dim = sa.shape[1]

    l1p = kparams["w_in"].shape[1] // 2      # padded layer-1 width per head
    l2p = kparams["w2"].shape[1]             # padded layer-2 width per head

    if tile_b is None:
        # 256 fills the 256-wide MXU on v6e/v7x and keeps per-step VMEM well
        # under the 16 MiB v5e / 32 MiB v7x scoped defaults (weights ~1.1 MiB
        # bf16 + small activation tiles).  Small batches use one small tile.
        tile_b = min(256, _round_up(max(batch, 1), 8))
    b_pad = _round_up(batch, tile_b)
    if b_pad != batch:
        sa = jnp.pad(sa, ((0, b_pad - batch), (0, 0)))
    grid = (pl.cdiv(b_pad, tile_b),)

    weight_names = ("w_in", "b14", "w2", "b2", "w5", "b5", "w3", "w6", "bout")
    weight_args = [kparams[n] for n in weight_names]
    # Constant index maps -> weights stay VMEM-resident across grid steps.
    weight_specs = [pl.BlockSpec(w.shape, lambda i: (0, 0)) for w in weight_args]

    weight_bytes = sum(int(w.size) * w.dtype.itemsize for w in weight_args)
    flops = 2 * b_pad * (in_dim * 2 * l1p + 2 * l1p * l2p + 2 * l2p * 128)
    bytes_accessed = weight_bytes + b_pad * (in_dim + 128) * 4

    out = pl.pallas_call(
        partial(_critic_kernel, l1p),
        out_shape=jax.ShapeDtypeStruct((b_pad, 128), jnp.float32),
        grid_spec=pltpu.PrefetchScalarGridSpec(
            num_scalar_prefetch=0,
            grid=grid,
            in_specs=[pl.BlockSpec((tile_b, in_dim), lambda i: (i, 0))]
                     + weight_specs,
            out_specs=pl.BlockSpec((tile_b, 128), lambda i: (i, 0)),
        ),
        compiler_params=pltpu.CompilerParams(
            dimension_semantics=("parallel",)),        # 2 TCs on v7x
        cost_estimate=pl.CostEstimate(
            flops=flops, transcendentals=0, bytes_accessed=bytes_accessed),
    )(sa, *weight_args)

    return out[:batch, 0:1], out[:batch, 1:2]


def init_params(key, state_dim, critic_action_dim, layer1_size, layer2_size):
    """Deterministic PyTorch-default-style init: U(-1/sqrt(fan_in), 1/sqrt(fan_in))."""
    dims = [
        ("critic_1", state_dim + critic_action_dim, layer1_size),
        ("critic_2", layer1_size, layer2_size),
        ("critic_3", layer2_size, 1),
        ("critic_4", state_dim + critic_action_dim, layer1_size),
        ("critic_5", layer1_size, layer2_size),
        ("critic_6", layer2_size, 1),
    ]
    params = {}
    for name, fan_in, fan_out in dims:
        key, kw, kb = jax.random.split(key, 3)
        bound = 1.0 / jnp.sqrt(jnp.float32(fan_in))
        # PyTorch Linear stores weight as (out_features, in_features)
        params[f"{name}.weight"] = jax.random.uniform(
            kw, (fan_out, fan_in), jnp.float32, -bound, bound)
        params[f"{name}.bias"] = jax.random.uniform(
            kb, (fan_out,), jnp.float32, -bound, bound)
    return params


def reference_forward(s, a, params):
    """Pure-JAX reference mirroring the PyTorch forward for validation."""
    sa = jnp.concatenate([s, a], axis=1)

    def lin(x, name):
        return jnp.dot(x, params[f"{name}.weight"].T,
                       precision=jax.lax.Precision.HIGHEST) + params[f"{name}.bias"]

    q1 = jax.nn.relu(lin(sa, "critic_1"))
    q1 = jax.nn.relu(lin(q1, "critic_2"))
    q1 = lin(q1, "critic_3")
    q2 = jax.nn.relu(lin(sa, "critic_4"))
    q2 = jax.nn.relu(lin(q2, "critic_5"))
    q2 = lin(q2, "critic_6")
    return q1, q2


if __name__ == "__main__":
    # Small shapes consistent with the module:
    #   state_dim + critic_action_dim feeds critic_1 / critic_4,
    #   layer1_size=400, layer2_size=300 as in the source file.
    # For real throughput the caller should batch >= 256 rows per call
    # (fills the MXU tile); the kernel pads/tiles any batch correctly.
    batch = 8
    state_dim = 24
    critic_action_dim = 40          # e.g. NumCore * NumAcce * Number_actions
    layer1_size = 400
    layer2_size = 300

    key = jax.random.PRNGKey(0)
    key, ks, ka, kp = jax.random.split(key, 4)
    s = jax.random.normal(ks, (batch, state_dim), jnp.float32)
    a = jax.random.normal(ka, (batch, critic_action_dim), jnp.float32)
    params = init_params(kp, state_dim, critic_action_dim, layer1_size, layer2_size)

    # One-time weight re-layout (outside the hot path).
    kparams = prepare_kernel_params(params)
    kparams = jax.tree_util.tree_map(jax.block_until_ready, kparams)

    q1, q2 = critic_forward(s, a, kparams)
    q1 = jax.block_until_ready(q1)
    q2 = jax.block_until_ready(q2)

    q1_ref, q2_ref = reference_forward(s, a, params)
    assert q1.shape == (batch, 1) and q2.shape == (batch, 1)
    # bf16 MXU operands vs f32 HIGHEST reference -> loosened tolerance.
    assert jnp.allclose(q1, q1_ref, atol=5e-2, rtol=5e-2)
    assert jnp.allclose(q2, q2_ref, atol=5e-2, rtol=5e-2)

    print("KERNEL_OK")
</pallas_src>

<mosaic_0001>
module attributes {stable_mosaic.version = 11 : i64} {
  func.func @_critic_kernel(%arg0: i32, %arg1: memref<8x64xf32, #tpu.memory_space<vmem>>, %arg2: memref<64x1024xbf16, #tpu.memory_space<vmem>>, %arg3: memref<1x1024xf32, #tpu.memory_space<vmem>>, %arg4: memref<512x384xbf16, #tpu.memory_space<vmem>>, %arg5: memref<1x384xf32, #tpu.memory_space<vmem>>, %arg6: memref<512x384xbf16, #tpu.memory_space<vmem>>, %arg7: memref<1x384xf32, #tpu.memory_space<vmem>>, %arg8: memref<384x128xbf16, #tpu.memory_space<vmem>>, %arg9: memref<384x128xbf16, #tpu.memory_space<vmem>>, %arg10: memref<1x128xf32, #tpu.memory_space<vmem>>, %arg11: memref<8x128xf32, #tpu.memory_space<vmem>>) attributes {dimension_semantics = [#tpu.dimension_semantics<parallel>], iteration_bounds = array<i64: 1>, scalar_prefetch = 0 : i64, scratch_operands = 0 : i64, tpu.core_type = #tpu.core_type<tc>, window_params = [{transform_indices = @transform_0, window_bounds = array<i64: 8, 64>}, {pipeline_mode = #tpu.pipeline_mode<synchronous>, transform_indices = @transform_1, window_bounds = array<i64: 64, 1024>}, {pipeline_mode = #tpu.pipeline_mode<synchronous>, transform_indices = @transform_2, window_bounds = array<i64: 1, 1024>}, {pipeline_mode = #tpu.pipeline_mode<synchronous>, transform_indices = @transform_3, window_bounds = array<i64: 512, 384>}, {pipeline_mode = #tpu.pipeline_mode<synchronous>, transform_indices = @transform_4, window_bounds = array<i64: 1, 384>}, {pipeline_mode = #tpu.pipeline_mode<synchronous>, transform_indices = @transform_5, window_bounds = array<i64: 512, 384>}, {pipeline_mode = #tpu.pipeline_mode<synchronous>, transform_indices = @transform_6, window_bounds = array<i64: 1, 384>}, {pipeline_mode = #tpu.pipeline_mode<synchronous>, transform_indices = @transform_7, window_bounds = array<i64: 384, 128>}, {pipeline_mode = #tpu.pipeline_mode<synchronous>, transform_indices = @transform_8, window_bounds = array<i64: 384, 128>}, {pipeline_mode = #tpu.pipeline_mode<synchronous>, transform_indices = @transform_9, window_bounds = array<i64: 1, 128>}, {transform_indices = @transform_10, window_bounds = array<i64: 8, 128>}]} {
    %c0 = arith.constant 0 : index
    %c0_0 = arith.constant 0 : index
    %0 = vector.load %arg1[%c0, %c0_0] : memref<8x64xf32, #tpu.memory_space<vmem>>, vector<8x64xf32>
    %1 = arith.truncf %0 : vector<8x64xf32> to vector<8x64xbf16>
    %c0_1 = arith.constant 0 : index
    %c0_2 = arith.constant 0 : index
    %2 = vector.load %arg2[%c0_1, %c0_2] : memref<64x1024xbf16, #tpu.memory_space<vmem>>, vector<64x1024xbf16>
    %cst = arith.constant dense<0.000000e+00> : vector<8x1024xf32>
    %3 = tpu.matmul %1, %2, %cst {dimension_numbers = #tpu.dot_dimension_numbers<[1], [0], [0], [1], [0, 0, 1, 1], [], []>} : vector<8x64xbf16>, vector<64x1024xbf16>, vector<8x1024xf32> -> vector<8x1024xf32>
    %c0_3 = arith.constant 0 : index
    %c0_4 = arith.constant 0 : index
    %4 = vector.load %arg3[%c0_3, %c0_4] : memref<1x1024xf32, #tpu.memory_space<vmem>>, vector<1x1024xf32>
    %5 = vector.broadcast %4 : vector<1x1024xf32> to vector<8x1024xf32>
    %6 = arith.addf %3, %5 : vector<8x1024xf32>
    %cst_5 = arith.constant 0.000000e+00 : f32
    %7 = vector.broadcast %cst_5 : f32 to vector<8x1024xf32>
    %8 = arith.maximumf %6, %7 : vector<8x1024xf32>
    %9 = vector.extract_strided_slice %8 {offsets = [0, 0], sizes = [8, 512], strides = [1, 1]} : vector<8x1024xf32> to vector<8x512xf32>
    %10 = arith.truncf %9 : vector<8x512xf32> to vector<8x512xbf16>
    %11 = vector.extract_strided_slice %8 {offsets = [0, 512], sizes = [8, 512], strides = [1, 1]} : vector<8x1024xf32> to vector<8x512xf32>
    %12 = arith.truncf %11 : vector<8x512xf32> to vector<8x512xbf16>
    %c0_6 = arith.constant 0 : index
    %c0_7 = arith.constant 0 : index
    %13 = vector.load %arg4[%c0_6, %c0_7] : memref<512x384xbf16, #tpu.memory_space<vmem>>, vector<512x384xbf16>
    %cst_8 = arith.constant dense<0.000000e+00> : vector<8x384xf32>
    %14 = tpu.matmul %10, %13, %cst_8 {dimension_numbers = #tpu.dot_dimension_numbers<[1], [0], [0], [1], [0, 0, 1, 1], [], []>} : vector<8x512xbf16>, vector<512x384xbf16>, vector<8x384xf32> -> vector<8x384xf32>
    %c0_9 = arith.constant 0 : index
    %c0_10 = arith.constant 0 : index
    %15 = vector.load %arg5[%c0_9, %c0_10] : memref<1x384xf32, #tpu.memory_space<vmem>>, vector<1x384xf32>
    %16 = vector.broadcast %15 : vector<1x384xf32> to vector<8x384xf32>
    %17 = arith.addf %14, %16 : vector<8x384xf32>
    %cst_11 = arith.constant 0.000000e+00 : f32
    %18 = vector.broadcast %cst_11 : f32 to vector<8x384xf32>
    %19 = arith.maximumf %17, %18 : vector<8x384xf32>
    %c0_12 = arith.constant 0 : index
    %c0_13 = arith.constant 0 : index
    %20 = vector.load %arg6[%c0_12, %c0_13] : memref<512x384xbf16, #tpu.memory_space<vmem>>, vector<512x384xbf16>
    %cst_14 = arith.constant dense<0.000000e+00> : vector<8x384xf32>
    %21 = tpu.matmul %12, %20, %cst_14 {dimension_numbers = #tpu.dot_dimension_numbers<[1], [0], [0], [1], [0, 0, 1, 1], [], []>} : vector<8x512xbf16>, vector<512x384xbf16>, vector<8x384xf32> -> vector<8x384xf32>
    %c0_15 = arith.constant 0 : index
    %c0_16 = arith.constant 0 : index
    %22 = vector.load %arg7[%c0_15, %c0_16] : memref<1x384xf32, #tpu.memory_space<vmem>>, vector<1x384xf32>
    %23 = vector.broadcast %22 : vector<1x384xf32> to vector<8x384xf32>
    %24 = arith.addf %21, %23 : vector<8x384xf32>
    %cst_17 = arith.constant 0.000000e+00 : f32
    %25 = vector.broadcast %cst_17 : f32 to vector<8x384xf32>
    %26 = arith.maximumf %24, %25 : vector<8x384xf32>
    %27 = arith.truncf %19 : vector<8x384xf32> to vector<8x384xbf16>
    %c0_18 = arith.constant 0 : index
    %c0_19 = arith.constant 0 : index
    %28 = vector.load %arg8[%c0_18, %c0_19] : memref<384x128xbf16, #tpu.memory_space<vmem>>, vector<384x128xbf16>
    %cst_20 = arith.constant dense<0.000000e+00> : vector<8x128xf32>
    %29 = tpu.matmul %27, %28, %cst_20 {dimension_numbers = #tpu.dot_dimension_numbers<[1], [0], [0], [1], [0, 0, 1, 1], [], []>} : vector<8x384xbf16>, vector<384x128xbf16>, vector<8x128xf32> -> vector<8x128xf32>
    %30 = arith.truncf %26 : vector<8x384xf32> to vector<8x384xbf16>
    %c0_21 = arith.constant 0 : index
    %c0_22 = arith.constant 0 : index
    %31 = vector.load %arg9[%c0_21, %c0_22] : memref<384x128xbf16, #tpu.memory_space<vmem>>, vector<384x128xbf16>
    %cst_23 = arith.constant dense<0.000000e+00> : vector<8x128xf32>
    %32 = tpu.matmul %30, %31, %cst_23 {dimension_numbers = #tpu.dot_dimension_numbers<[1], [0], [0], [1], [0, 0, 1, 1], [], []>} : vector<8x384xbf16>, vector<384x128xbf16>, vector<8x128xf32> -> vector<8x128xf32>
    %33 = arith.addf %29, %32 : vector<8x128xf32>
    %c0_24 = arith.constant 0 : index
    %c0_25 = arith.constant 0 : index
    %34 = vector.load %arg10[%c0_24, %c0_25] : memref<1x128xf32, #tpu.memory_space<vmem>>, vector<1x128xf32>
    %35 = vector.broadcast %34 : vector<1x128xf32> to vector<8x128xf32>
    %36 = arith.addf %33, %35 : vector<8x128xf32>
    %c0_26 = arith.constant 0 : index
    %c0_27 = arith.constant 0 : index
    %37 = vector.load %arg11[%c0_26, %c0_27] : memref<8x128xf32, #tpu.memory_space<vmem>>, vector<8x128xf32>
    tpu.vector_store %arg11[%c0_26, %c0_27], %36 {strides = array<i32>} : memref<8x128xf32, #tpu.memory_space<vmem>>, vector<8x128xf32>,
    return
  }
  func.func @transform_0(%arg0: i32) -> (i32, i32) {
    %c0_i32 = arith.constant 0 : i32
    %c0_i32_0 = arith.constant 0 : i32
    return %arg0, %c0_i32 : i32, i32
  }
  func.func @transform_1(%arg0: i32) -> (i32, i32) {
    %c0_i32 = arith.constant 0 : i32
    %c0_i32_0 = arith.constant 0 : i32
    %c0_i32_1 = arith.constant 0 : i32
    return %c0_i32, %c0_i32_0 : i32, i32
  }
  func.func @transform_2(%arg0: i32) -> (i32, i32) {
    %c0_i32 = arith.constant 0 : i32
    %c0_i32_0 = arith.constant 0 : i32
    %c0_i32_1 = arith.constant 0 : i32
    return %c0_i32, %c0_i32_0 : i32, i32
  }
  func.func @transform_3(%arg0: i32) -> (i32, i32) {
    %c0_i32 = arith.constant 0 : i32
    %c0_i32_0 = arith.constant 0 : i32
    %c0_i32_1 = arith.constant 0 : i32
    return %c0_i32, %c0_i32_0 : i32, i32
  }
  func.func @transform_4(%arg0: i32) -> (i32, i32) {
    %c0_i32 = arith.constant 0 : i32
    %c0_i32_0 = arith.constant 0 : i32
    %c0_i32_1 = arith.constant 0 : i32
    return %c0_i32, %c0_i32_0 : i32, i32
  }
  func.func @transform_5(%arg0: i32) -> (i32, i32) {
    %c0_i32 = arith.constant 0 : i32
    %c0_i32_0 = arith.constant 0 : i32
    %c0_i32_1 = arith.constant 0 : i32
    return %c0_i32, %c0_i32_0 : i32, i32
  }
  func.func @transform_6(%arg0: i32) -> (i32, i32) {
    %c0_i32 = arith.constant 0 : i32
    %c0_i32_0 = arith.constant 0 : i32
    %c0_i32_1 = arith.constant 0 : i32
    return %c0_i32, %c0_i32_0 : i32, i32
  }
  func.func @transform_7(%arg0: i32) -> (i32, i32) {
    %c0_i32 = arith.constant 0 : i32
    %c0_i32_0 = arith.constant 0 : i32
    %c0_i32_1 = arith.constant 0 : i32
    return %c0_i32, %c0_i32_0 : i32, i32
  }
  func.func @transform_8(%arg0: i32) -> (i32, i32) {
    %c0_i32 = arith.constant 0 : i32
    %c0_i32_0 = arith.constant 0 : i32
    %c0_i32_1 = arith.constant 0 : i32
    return %c0_i32, %c0_i32_0 : i32, i32
  }
  func.func @transform_9(%arg0: i32) -> (i32, i32) {
    %c0_i32 = arith.constant 0 : i32
    %c0_i32_0 = arith.constant 0 : i32
    %c0_i32_1 = arith.constant 0 : i32
    return %c0_i32, %c0_i32_0 : i32, i32
  }
  func.func @transform_10(%arg0: i32) -> (i32, i32) {
    %c0_i32 = arith.constant 0 : i32
    %c0_i32_0 = arith.constant 0 : i32
    return %arg0, %c0_i32 : i32, i32
  }
}

</mosaic_0001>

<llo_original>
// kernel: tpu_custom_call.1
$region0: #{tpu_custom_call.1}
  #allocation0 [shape = 'u32[]', space=smem, size = 0x4, offset = 0x4, fixed_abs, tag = 'smem constant byte address 0x4 - core index']
  #allocation1 [shape = 'u32[144,128]{1,0:T(1,128)}', space=vmem, size = 0x12000, scoped, tag = 'internal scratch']
  %s0 = inlined_call_operand.hbm [shape: f32[8,64], index: 0, kind: input, shape index: {}]
  %s1 = inlined_call_operand.hbm [shape: bf16[64,1024], index: 1, kind: input, shape index: {}]
  %s2 = inlined_call_operand.hbm [shape: f32[1,1024], index: 2, kind: input, shape index: {}]
  %s3 = inlined_call_operand.hbm [shape: bf16[512,384], index: 3, kind: input, shape index: {}]
  %s4 = inlined_call_operand.vmem [shape: f32[1,384], index: 4, kind: input, shape index: {}]
  %s5 = inlined_call_operand.hbm [shape: bf16[512,384], index: 5, kind: input, shape index: {}]
  %s6 = inlined_call_operand.vmem [shape: f32[1,384], index: 6, kind: input, shape index: {}]
  %s7 = inlined_call_operand.hbm [shape: bf16[384,128], index: 7, kind: input, shape index: {}]
  %s8 = inlined_call_operand.hbm [shape: bf16[384,128], index: 8, kind: input, shape index: {}]
  %s9 = inlined_call_operand.vmem [shape: f32[1,128], index: 9, kind: input, shape index: {}]
  %s10 = inlined_call_operand.hbm [shape: f32[8,128], index: 10, kind: output, shape index: {}]
  %s11 = sld [smem:[#allocation0]]
  $region78: #{tpu_custom_call.1} parent=0
    _
  %s13 = ssub.s32 1, %s11
  %s14 = scalar_select 0, %s13, %s11
  $region1: #{tpu_custom_call.1} parent=0
    #allocation2 [shape = 'u8[4096]{0}', space=vmem, size = 0x1000, scoped, tag = 'input window, operand 0, single buffered']
    #allocation3 [shape = 's32[1]{0}', space=sflag, size = 0x4, scoped, tag = 'scoped memory for tpu_custom_call.1']
    #allocation4 [shape = 's32[1]{0}', space=sflag, size = 0x4, scoped, tag = 'scoped memory for tpu_custom_call.1']
    #allocation5 [shape = 'u8[131072]{0}', space=vmem, size = 0x20000, scoped, tag = 'input window, operand 1, single buffered']
    #allocation6 [shape = 's32[1]{0}', space=sflag, size = 0x4, scoped, tag = 'scoped memory for tpu_custom_call.1']
    #allocation7 [shape = 'u8[4096]{0}', space=vmem, size = 0x1000, scoped, tag = 'input window, operand 2, single buffered']
    #allocation8 [shape = 'u8[393216]{0}', space=vmem, size = 0x60000, scoped, tag = 'input window, operand 3, single buffered']
    #allocation9 [shape = 's32[1]{0}', space=sflag, size = 0x4, scoped, tag = 'scoped memory for tpu_custom_call.1']
    #allocation10 [shape = 'u8[393216]{0}', space=vmem, size = 0x60000, scoped, tag = 'input window, operand 5, single buffered']
    #allocation11 [shape = 'u8[98304]{0}', space=vmem, size = 0x18000, scoped, tag = 'input window, operand 7, single buffered']
    #allocation12 [shape = 's32[1]{0}', space=sflag, size = 0x4, scoped, tag = 'scoped memory for tpu_custom_call.1']
    #allocation13 [shape = 'u8[98304]{0}', space=vmem, size = 0x18000, scoped, tag = 'input window, operand 8, single buffered']
    #allocation14 [shape = 'u8[4096]{0}', space=vmem, size = 0x1000, scoped, tag = 'output window, operand 0, single buffered']
    %15 = vsyncpa [#allocation3], 0
    %16 = vsyncpa [#allocation6], 0
    %17 = vsyncpa [#allocation9], 0
    %18 = vsyncpa [#allocation12], 0
    %19 = vsyncpa [#allocation4], 0
    // Predicated region
    $region2: #{tpu_custom_call.1} parent=1 // pred_check
      _
    $region3: #{tpu_custom_call.1} parent=1 // pred_check_branch
      %21 = sbr.rel (0) target = $region5
    $region4: #{tpu_custom_call.1} parent=1 // pred_region
      %s23 = ssub.s32 128, 128
      %24 = vsyncadd [#allocation3], %s23
      %s26 = sshll.u32 [#allocation2], 4
      %s27 = int_to_ptr.vmem [resolvable:$true] %s26
      %29 = dma.hbm_to_vmem [thread:$0]  %s0, 128, %s27, [#allocation3]
    $region5: #{tpu_custom_call.1} parent=1 // pred_fallthru
      _
    // Predicated region
    $region6: #{tpu_custom_call.1} parent=1 // pred_check
      _
    $region7: #{tpu_custom_call.1} parent=1 // pred_check_branch
      %31 = sbr.rel (0) target = $region9
    $region8: #{tpu_custom_call.1} parent=1 // pred_region
      %s33 = ssub.s32 4096, 4096
      %34 = vsyncadd [#allocation6], %s33
      %s35 = sshll.u32 [#allocation5], 4
      %s36 = int_to_ptr.vmem [resolvable:$true] %s35
      %41 = dma.hbm_to_vmem [thread:$0]  %s1, 4096, %s36, [#allocation6], 512, 512, 32
    $region9: #{tpu_custom_call.1} parent=1 // pred_fallthru
      _
    // Predicated region
    $region10: #{tpu_custom_call.1} parent=1 // pred_check
      _
    $region11: #{tpu_custom_call.1} parent=1 // pred_check_branch
      %43 = sbr.rel (0) target = $region13
    $region12: #{tpu_custom_call.1} parent=1 // pred_region
      %s45 = ssub.s32 128, 128
      %46 = vsyncadd [#allocation6], %s45
      %s48 = sshll.u32 [#allocation7], 4
      %s49 = int_to_ptr.vmem [resolvable:$true] %s48
      %51 = dma.hbm_to_vmem [thread:$0]  %s2, 128, %s49, [#allocation6]
    $region13: #{tpu_custom_call.1} parent=1 // pred_fallthru
      _
    // Predicated region
    $region14: #{tpu_custom_call.1} parent=1 // pred_check
      _
    $region15: #{tpu_custom_call.1} parent=1 // pred_check_branch
      %53 = sbr.rel (0) target = $region17
    $region16: #{tpu_custom_call.1} parent=1 // pred_region
      %s55 = ssub.s32 12288, 12288
      %56 = vsyncadd [#allocation9], %s55
      %s57 = sshll.u32 [#allocation8], 4
      %s58 = int_to_ptr.vmem [resolvable:$true] %s57
      %63 = dma.hbm_to_vmem [thread:$0]  %s3, 12288, %s58, [#allocation9], 192, 192, 12
    $region17: #{tpu_custom_call.1} parent=1 // pred_fallthru
      _
    // Predicated region
    $region18: #{tpu_custom_call.1} parent=1 // pred_check
      _
    $region19: #{tpu_custom_call.1} parent=1 // pred_check_branch
      %65 = sbr.rel (0) target = $region21
    $region20: #{tpu_custom_call.1} parent=1 // pred_region
      _
    $region21: #{tpu_custom_call.1} parent=1 // pred_fallthru
      _
    // Predicated region
    $region22: #{tpu_custom_call.1} parent=1 // pred_check
      _
    $region23: #{tpu_custom_call.1} parent=1 // pred_check_branch
      %67 = sbr.rel (0) target = $region25
    $region24: #{tpu_custom_call.1} parent=1 // pred_region
      %s69 = ssub.s32 12288, 12288
      %70 = vsyncadd [#allocation9], %s69
      %s71 = sshll.u32 [#allocation10], 4
      %s72 = int_to_ptr.vmem [resolvable:$true] %s71
      %77 = dma.hbm_to_vmem [thread:$0]  %s5, 12288, %s72, [#allocation9], 192, 192, 12
    $region25: #{tpu_custom_call.1} parent=1 // pred_fallthru
      _
    // Predicated region
    $region26: #{tpu_custom_call.1} parent=1 // pred_check
      _
    $region27: #{tpu_custom_call.1} parent=1 // pred_check_branch
      %79 = sbr.rel (0) target = $region29
    $region28: #{tpu_custom_call.1} parent=1 // pred_region
      _
    $region29: #{tpu_custom_call.1} parent=1 // pred_fallthru
      _
    // Predicated region
    $region30: #{tpu_custom_call.1} parent=1 // pred_check
      _
    $region31: #{tpu_custom_call.1} parent=1 // pred_check_branch
      %81 = sbr.rel (0) target = $region33
    $region32: #{tpu_custom_call.1} parent=1 // pred_region
      %s83 = ssub.s32 3072, 3072
      %84 = vsyncadd [#allocation12], %s83
      %s85 = sshll.u32 [#allocation11], 4
      %s86 = int_to_ptr.vmem [resolvable:$true] %s85
      %91 = dma.hbm_to_vmem [thread:$0]  %s7, 3072, %s86, [#allocation12], 64, 64, 4
    $region33: #{tpu_custom_call.1} parent=1 // pred_fallthru
      _
    // Predicated region
    $region34: #{tpu_custom_call.1} parent=1 // pred_check
      _
    $region35: #{tpu_custom_call.1} parent=1 // pred_check_branch
      %93 = sbr.rel (0) target = $region37
    $region36: #{tpu_custom_call.1} parent=1 // pred_region
      %s95 = ssub.s32 3072, 3072
      %96 = vsyncadd [#allocation12], %s95
      %s97 = sshll.u32 [#allocation13], 4
      %s98 = int_to_ptr.vmem [resolvable:$true] %s97
      %103 = dma.hbm_to_vmem [thread:$0]  %s8, 3072, %s98, [#allocation12], 64, 64, 4
    $region37: #{tpu_custom_call.1} parent=1 // pred_fallthru
      _
    // Predicated region
    $region38: #{tpu_custom_call.1} parent=1 // pred_check
      _
    $region39: #{tpu_custom_call.1} parent=1 // pred_check_branch
      %105 = sbr.rel (0) target = $region41
    $region40: #{tpu_custom_call.1} parent=1 // pred_region
      _
    $region41: #{tpu_custom_call.1} parent=1 // pred_fallthru
      _
    // Predicated region
    $region42: #{tpu_custom_call.1} parent=1 // pred_check
      _
    $region43: #{tpu_custom_call.1} parent=1 // pred_check_branch
      %107 = sbr.rel (0) target = $region45
    $region44: #{tpu_custom_call.1} parent=1 // pred_region
      %108 = dma.done [#allocation3], 128
    $region45: #{tpu_custom_call.1} parent=1 // pred_fallthru
      _
    // Predicated region
    $region46: #{tpu_custom_call.1} parent=1 // pred_check
      _
    $region47: #{tpu_custom_call.1} parent=1 // pred_check_branch
      %110 = sbr.rel (0) target = $region49
    $region48: #{tpu_custom_call.1} parent=1 // pred_region
      %111 = dma.done [#allocation6], 4096
    $region49: #{tpu_custom_call.1} parent=1 // pred_fallthru
      _
    // Predicated region
    $region50: #{tpu_custom_call.1} parent=1 // pred_check
      _
    $region51: #{tpu_custom_call.1} parent=1 // pred_check_branch
      %113 = sbr.rel (0) target = $region53
    $region52: #{tpu_custom_call.1} parent=1 // pred_region
      %114 = dma.done [#allocation6], 128
    $region53: #{tpu_custom_call.1} parent=1 // pred_fallthru
      _
    // Predicated region
    $region54: #{tpu_custom_call.1} parent=1 // pred_check
      _
    $region55: #{tpu_custom_call.1} parent=1 // pred_check_branch
      %116 = sbr.rel (0) target = $region57
    $region56: #{tpu_custom_call.1} parent=1 // pred_region
      %117 = dma.done [#allocation9], 12288
    $region57: #{tpu_custom_call.1} parent=1 // pred_fallthru
      _
    // Predicated region
    $region58: #{tpu_custom_call.1} parent=1 // pred_check
      _
    $region59: #{tpu_custom_call.1} parent=1 // pred_check_branch
      %119 = sbr.rel (0) target = $region61
    $region60: #{tpu_custom_call.1} parent=1 // pred_region
      %120 = dma.done [#allocation9], 12288
    $region61: #{tpu_custom_call.1} parent=1 // pred_fallthru
      _
    // Predicated region
    $region62: #{tpu_custom_call.1} parent=1 // pred_check
      _
    $region63: #{tpu_custom_call.1} parent=1 // pred_check_branch
      %122 = sbr.rel (0) target = $region65
    $region64: #{tpu_custom_call.1} parent=1 // pred_region
      %123 = dma.done [#allocation12], 3072
    $region65: #{tpu_custom_call.1} parent=1 // pred_fallthru
      _
    // Predicated region
    $region66: #{tpu_custom_call.1} parent=1 // pred_check
      _
    $region67: #{tpu_custom_call.1} parent=1 // pred_check_branch
      %125 = sbr.rel (0) target = $region69
    $region68: #{tpu_custom_call.1} parent=1 // pred_region
      %126 = dma.done [#allocation12], 3072
    $region69: #{tpu_custom_call.1} parent=1 // pred_fallthru
      _
    %v128 = vld [vmem:[#allocation2] sm:$0xff]
    %v129 = vpack.c.bf16 %v128, %v128
    %v130 = vld [vmem:[#allocation5] sm:$0xff]
    %v131 = vld [vmem:[#allocation5 + $0x8] sm:$0xff]
    %v132 = vld [vmem:[#allocation5 + $0x10] sm:$0xff]
    %v133 = vld [vmem:[#allocation5 + $0x18] sm:$0xff]
    %v134 = vld [vmem:[#allocation5 + $0x20] sm:$0xff]
    %v135 = vld [vmem:[#allocation5 + $0x28] sm:$0xff]
    %v136 = vld [vmem:[#allocation5 + $0x30] sm:$0xff]
    %v137 = vld [vmem:[#allocation5 + $0x38] sm:$0xff]
    %v138 = vld [vmem:[#allocation5 + $0x40] sm:$0xff]
    %v139 = vld [vmem:[#allocation5 + $0x48] sm:$0xff]
    %v140 = vld [vmem:[#allocation5 + $0x50] sm:$0xff]
    %v141 = vld [vmem:[#allocation5 + $0x58] sm:$0xff]
    %v142 = vld [vmem:[#allocation5 + $0x60] sm:$0xff]
    %v143 = vld [vmem:[#allocation5 + $0x68] sm:$0xff]
    %v144 = vld [vmem:[#allocation5 + $0x70] sm:$0xff]
    %v145 = vld [vmem:[#allocation5 + $0x78] sm:$0xff]
    %v146 = vld [vmem:[#allocation5 + $0x80] sm:$0xff]
    %v147 = vld [vmem:[#allocation5 + $0x88] sm:$0xff]
    %v148 = vld [vmem:[#allocation5 + $0x90] sm:$0xff]
    %v149 = vld [vmem:[#allocation5 + $0x98] sm:$0xff]
    %v150 = vld [vmem:[#allocation5 + $0xa0] sm:$0xff]
    %v151 = vld [vmem:[#allocation5 + $0xa8] sm:$0xff]
    %v152 = vld [vmem:[#allocation5 + $0xb0] sm:$0xff]
    %v153 = vld [vmem:[#allocation5 + $0xb8] sm:$0xff]
    %v154 = vld [vmem:[#allocation5 + $0xc0] sm:$0xff]
    %v155 = vld [vmem:[#allocation5 + $0xc8] sm:$0xff]
    %v156 = vld [vmem:[#allocation5 + $0xd0] sm:$0xff]
    %v157 = vld [vmem:[#allocation5 + $0xd8] sm:$0xff]
    %v158 = vld [vmem:[#allocation5 + $0xe0] sm:$0xff]
    %v159 = vld [vmem:[#allocation5 + $0xe8] sm:$0xff]
    %v160 = vld [vmem:[#allocation5 + $0xf0] sm:$0xff]
    %v161 = vld [vmem:[#allocation5 + $0xf8] sm:$0xff]
    %v162 = vld [vmem:[#allocation7] sm:$0xff]
    %v164 = vlaneseq
    %v165 = vshrl.u32 %v164, 7
    %v166 = vsub.s32 0, %v165
    %v167 = vrot.slane %v162, %v166
    %v168 = vlaneseq
    %v169 = vshrl.u32 %v168, 7
    %v170 = vsub.s32 1, %v169
    %v171 = vrot.slane %v162, %v170
    %v172 = vlaneseq
    %v173 = vshrl.u32 %v172, 7
    %v174 = vsub.s32 2, %v173
    %v175 = vrot.slane %v162, %v174
    %v176 = vlaneseq
    %v177 = vshrl.u32 %v176, 7
    %v178 = vsub.s32 3, %v177
    %v179 = vrot.slane %v162, %v178
    %v180 = vlaneseq
    %v181 = vshrl.u32 %v180, 7
    %v182 = vsub.s32 4, %v181
    %v183 = vrot.slane %v162, %v182
    %v184 = vlaneseq
    %v185 = vshrl.u32 %v184, 7
    %v186 = vsub.s32 5, %v185
    %v187 = vrot.slane %v162, %v186
    %v188 = vlaneseq
    %v189 = vshrl.u32 %v188, 7
    %v190 = vsub.s32 6, %v189
    %v191 = vrot.slane %v162, %v190
    %v192 = vlaneseq
    %v193 = vshrl.u32 %v192, 7
    %v194 = vsub.s32 7, %v193
    %v195 = vrot.slane %v162, %v194
    %v236 = vunpack.c.l.b16 %v130
    %v237 = vunpack.c.h.b16 %v130
    %v238 = vunpack.c.l.b16 %v131
    %v239 = vunpack.c.h.b16 %v131
    %v240 = vunpack.c.l.b16 %v132
    %v241 = vunpack.c.h.b16 %v132
    %v242 = vunpack.c.l.b16 %v133
    %v243 = vunpack.c.h.b16 %v133
    %v244 = vunpack.c.l.b16 %v134
    %v245 = vunpack.c.h.b16 %v134
    %v246 = vunpack.c.l.b16 %v135
    %v247 = vunpack.c.h.b16 %v135
    %v248 = vunpack.c.l.b16 %v136
    %v249 = vunpack.c.h.b16 %v136
    %v250 = vunpack.c.l.b16 %v137
    %v251 = vunpack.c.h.b16 %v137
    %v252 = vunpack.c.l.b16 %v138
    %v253 = vunpack.c.h.b16 %v138
    %v254 = vunpack.c.l.b16 %v139
    %v255 = vunpack.c.h.b16 %v139
    %v256 = vunpack.c.l.b16 %v140
    %v257 = vunpack.c.h.b16 %v140
    %v258 = vunpack.c.l.b16 %v141
    %v259 = vunpack.c.h.b16 %v141
    %v260 = vunpack.c.l.b16 %v142
    %v261 = vunpack.c.h.b16 %v142
    %v262 = vunpack.c.l.b16 %v143
    %v263 = vunpack.c.h.b16 %v143
    %v264 = vunpack.c.l.b16 %v144
    %v265 = vunpack.c.h.b16 %v144
    %v266 = vunpack.c.l.b16 %v145
    %v267 = vunpack.c.h.b16 %v145
    %v268 = vunpack.c.l.b16 %v146
    %v269 = vunpack.c.h.b16 %v146
    %v270 = vunpack.c.l.b16 %v147
    %v271 = vunpack.c.h.b16 %v147
    %v272 = vunpack.c.l.b16 %v148
    %v273 = vunpack.c.h.b16 %v148
    %v274 = vunpack.c.l.b16 %v149
    %v275 = vunpack.c.h.b16 %v149
    %v276 = vunpack.c.l.b16 %v150
    %v277 = vunpack.c.h.b16 %v150
    %v278 = vunpack.c.l.b16 %v151
    %v279 = vunpack.c.h.b16 %v151
    %v280 = vunpack.c.l.b16 %v152
    %v281 = vunpack.c.h.b16 %v152
    %v282 = vunpack.c.l.b16 %v153
    %v283 = vunpack.c.h.b16 %v153
    %v284 = vunpack.c.l.b16 %v154
    %v285 = vunpack.c.h.b16 %v154
    %v286 = vunpack.c.l.b16 %v155
    %v287 = vunpack.c.h.b16 %v155
    %v288 = vunpack.c.l.b16 %v156
    %v289 = vunpack.c.h.b16 %v156
    %v290 = vunpack.c.l.b16 %v157
    %v291 = vunpack.c.h.b16 %v157
    %v292 = vunpack.c.l.b16 %v158
    %v293 = vunpack.c.h.b16 %v158
    %v294 = vunpack.c.l.b16 %v159
    %v295 = vunpack.c.h.b16 %v159
    %v296 = vunpack.c.l.b16 %v160
    %v297 = vunpack.c.h.b16 %v160
    %v298 = vunpack.c.l.b16 %v161
    %v299 = vunpack.c.h.b16 %v161
    %v300 = vpack.c.b16 %v244, %v236
    %v301 = vpack.c.b16 %v245, %v237
    %v302 = vpack.c.b16 %v246, %v238
    %v303 = vpack.c.b16 %v247, %v239
    %v304 = vpack.c.b16 %v248, %v240
    %v305 = vpack.c.b16 %v249, %v241
    %v306 = vpack.c.b16 %v250, %v242
    %v307 = vpack.c.b16 %v251, %v243
    %v308 = vpack.c.b16 %v260, %v252
    %v309 = vpack.c.b16 %v261, %v253
    %v310 = vpack.c.b16 %v262, %v254
    %v311 = vpack.c.b16 %v263, %v255
    %v312 = vpack.c.b16 %v264, %v256
    %v313 = vpack.c.b16 %v265, %v257
    %v314 = vpack.c.b16 %v266, %v258
    %v315 = vpack.c.b16 %v267, %v259
    %v316 = vpack.c.b16 %v276, %v268
    %v317 = vpack.c.b16 %v277, %v269
    %v318 = vpack.c.b16 %v278, %v270
    %v319 = vpack.c.b16 %v279, %v271
    %v320 = vpack.c.b16 %v280, %v272
    %v321 = vpack.c.b16 %v281, %v273
    %v322 = vpack.c.b16 %v282, %v274
    %v323 = vpack.c.b16 %v283, %v275
    %v324 = vpack.c.b16 %v292, %v284
    %v325 = vpack.c.b16 %v293, %v285
    %v326 = vpack.c.b16 %v294, %v286
    %v327 = vpack.c.b16 %v295, %v287
    %v328 = vpack.c.b16 %v296, %v288
    %v329 = vpack.c.b16 %v297, %v289
    %v330 = vpack.c.b16 %v298, %v290
    %v331 = vpack.c.b16 %v299, %v291
    %vm364 = vcmask 523264
    %v366 = vsel %vm364, %v129, 0
    %368 = vmatprep.subr.bf16.mxu0 %v301
    %369 = vmatpush1.bf16.msra.mxu0 %v300
    %370 = vmatprep.subr.bf16.mxu0 %v309
    %371 = vmatpush1.bf16.msra.mxu0 %v308
    %372 = vmatprep.subr.bf16.mxu0 %v317
    %373 = vmatpush1.bf16.msra.mxu0 %v316
    %374 = vmatprep.subr.bf16.mxu0 %v325
    %375 = vmatpush1.bf16.msra.mxu0 %v324
    %376 = vmatprep.subr.bf16.mxu0 0
    %377 = vmatpush1.bf16.msra.mxu0 0
    %378 = vmatprep.subr.bf16.mxu0 0
    %379 = vmatpush1.bf16.msra.mxu0 0
    %380 = vmatprep.subr.bf16.mxu0 0
    %381 = vmatpush1.bf16.msra.mxu0 0
    %382 = vmatprep.subr.bf16.mxu0 0
    %383 = vmatpush1.bf16.msra.mxu0 0
    %384 = vmatprep.subr.bf16.mxu0 0
    %385 = vmatpush1.bf16.msra.mxu0 0
    %386 = vmatprep.subr.bf16.mxu0 0
    %387 = vmatpush1.bf16.msra.mxu0 0
    %388 = vmatprep.subr.bf16.mxu0 0
    %389 = vmatpush1.bf16.msra.mxu0 0
    %390 = vmatprep.subr.bf16.mxu0 0
    %391 = vmatpush1.bf16.msra.mxu0 0
    %392 = vmatprep.subr.bf16.mxu0 0
    %393 = vmatpush1.bf16.msra.mxu0 0
    %394 = vmatprep.subr.bf16.mxu0 0
    %395 = vmatpush1.bf16.msra.mxu0 0
    %396 = vmatprep.subr.bf16.mxu0 0
    %397 = vmatpush1.bf16.msra.mxu0 0
    %398 = vmatprep.subr.bf16.mxu0 0
    %399 = vmatpush1.bf16.msra.mxu0 0
    %400 = vmatprep.mubr.bf16.mxu0 0
    %401 = vmatmul.mubr.bf16.gmra.mrb[0].mxu0 %v366
    %v402 = vpop.f32.mrb[0].mxu0
    %v403 = vadd.f32 %v167, %v402
    %v404 = vpop.f32.mrb[0].mxu0
    %v405 = vadd.f32 %v171, %v404
    %v406 = vpop.f32.mrb[0].mxu0
    %v407 = vpop.f32.mrb[0].mxu0
    %408 = vdwg.mxu0
    %409 = vmatprep.subr.bf16.mxu0 %v303
    %410 = vmatpush1.bf16.msra.mxu0 %v302
    %411 = vmatprep.subr.bf16.mxu0 %v311
    %412 = vmatpush1.bf16.msra.mxu0 %v310
    %413 = vmatprep.subr.bf16.mxu0 %v319
    %414 = vmatpush1.bf16.msra.mxu0 %v318
    %415 = vmatprep.subr.bf16.mxu0 %v327
    %416 = vmatpush1.bf16.msra.mxu0 %v326
    %417 = vmatprep.subr.bf16.mxu0 0
    %418 = vmatpush1.bf16.msra.mxu0 0
    %419 = vmatprep.subr.bf16.mxu0 0
    %420 = vmatpush1.bf16.msra.mxu0 0
    %421 = vmatprep.subr.bf16.mxu0 0
    %422 = vmatpush1.bf16.msra.mxu0 0
    %423 = vmatprep.subr.bf16.mxu0 0
    %424 = vmatpush1.bf16.msra.mxu0 0
    %425 = vmatprep.subr.bf16.mxu0 0
    %426 = vmatpush1.bf16.msra.mxu0 0
    %427 = vmatprep.subr.bf16.mxu0 0
    %428 = vmatpush1.bf16.msra.mxu0 0
    %429 = vmatprep.subr.bf16.mxu0 0
    %430 = vmatpush1.bf16.msra.mxu0 0
    %431 = vmatprep.subr.bf16.mxu0 0
    %432 = vmatpush1.bf16.msra.mxu0 0
    %433 = vmatprep.subr.bf16.mxu0 0
    %434 = vmatpush1.bf16.msra.mxu0 0
    %435 = vmatprep.subr.bf16.mxu0 0
    %436 = vmatpush1.bf16.msra.mxu0 0
    %437 = vmatprep.subr.bf16.mxu0 0
    %438 = vmatpush1.bf16.msra.mxu0 0
    %439 = vmatprep.subr.bf16.mxu0 0
    %440 = vmatpush1.bf16.msra.mxu0 0
    %441 = vmatprep.mubr.bf16.mxu0 0
    %442 = vmatmul.mubr.bf16.gmra.mrb[0].mxu0 %v366
    %v443 = vpop.f32.mrb[0].mxu0
    %v444 = vadd.f32 %v175, %v443
    %v445 = vpop.f32.mrb[0].mxu0
    %v446 = vadd.f32 %v179, %v445
    %v447 = vpop.f32.mrb[0].mxu0
    %v448 = vpop.f32.mrb[0].mxu0
    %449 = vdwg.mxu0
    %450 = vmatprep.subr.bf16.mxu0 %v305
    %451 = vmatpush1.bf16.msra.mxu0 %v304
    %452 = vmatprep.subr.bf16.mxu0 %v313
    %453 = vmatpush1.bf16.msra.mxu0 %v312
    %454 = vmatprep.subr.bf16.mxu0 %v321
    %455 = vmatpush1.bf16.msra.mxu0 %v320
    %456 = vmatprep.subr.bf16.mxu0 %v329
    %457 = vmatpush1.bf16.msra.mxu0 %v328
    %458 = vmatprep.subr.bf16.mxu0 0
    %459 = vmatpush1.bf16.msra.mxu0 0
    %460 = vmatprep.subr.bf16.mxu0 0
    %461 = vmatpush1.bf16.msra.mxu0 0
    %462 = vmatprep.subr.bf16.mxu0 0
    %463 = vmatpush1.bf16.msra.mxu0 0
    %464 = vmatprep.subr.bf16.mxu0 0
    %465 = vmatpush1.bf16.msra.mxu0 0
    %466 = vmatprep.subr.bf16.mxu0 0
    %467 = vmatpush1.bf16.msra.mxu0 0
    %468 = vmatprep.subr.bf16.mxu0 0
    %469 = vmatpush1.bf16.msra.mxu0 0
    %470 = vmatprep.subr.bf16.mxu0 0
    %471 = vmatpush1.bf16.msra.mxu0 0
    %472 = vmatprep.subr.bf16.mxu0 0
    %473 = vmatpush1.bf16.msra.mxu0 0
    %474 = vmatprep.subr.bf16.mxu0 0
    %475 = vmatpush1.bf16.msra.mxu0 0
    %476 = vmatprep.subr.bf16.mxu0 0
    %477 = vmatpush1.bf16.msra.mxu0 0
    %478 = vmatprep.subr.bf16.mxu0 0
    %479 = vmatpush1.bf16.msra.mxu0 0
    %480 = vmatprep.subr.bf16.mxu0 0
    %481 = vmatpush1.bf16.msra.mxu0 0
    %482 = vmatprep.mubr.bf16.mxu0 0
    %483 = vmatmul.mubr.bf16.gmra.mrb[0].mxu0 %v366
    %v484 = vpop.f32.mrb[0].mxu0
    %v485 = vadd.f32 %v183, %v484
    %v486 = vpop.f32.mrb[0].mxu0
    %v487 = vadd.f32 %v187, %v486
    %v488 = vpop.f32.mrb[0].mxu0
    %v489 = vpop.f32.mrb[0].mxu0
    %490 = vdwg.mxu0
    %491 = vmatprep.subr.bf16.mxu0 %v307
    %492 = vmatpush1.bf16.msra.mxu0 %v306
    %493 = vmatprep.subr.bf16.mxu0 %v315
    %494 = vmatpush1.bf16.msra.mxu0 %v314
    %495 = vmatprep.subr.bf16.mxu0 %v323
    %496 = vmatpush1.bf16.msra.mxu0 %v322
    %497 = vmatprep.subr.bf16.mxu0 %v331
    %498 = vmatpush1.bf16.msra.mxu0 %v330
    %499 = vmatprep.subr.bf16.mxu0 0
    %500 = vmatpush1.bf16.msra.mxu0 0
    %501 = vmatprep.subr.bf16.mxu0 0
    %502 = vmatpush1.bf16.msra.mxu0 0
    %503 = vmatprep.subr.bf16.mxu0 0
    %504 = vmatpush1.bf16.msra.mxu0 0
    %505 = vmatprep.subr.bf16.mxu0 0
    %506 = vmatpush1.bf16.msra.mxu0 0
    %507 = vmatprep.subr.bf16.mxu0 0
    %508 = vmatpush1.bf16.msra.mxu0 0
    %509 = vmatprep.subr.bf16.mxu0 0
    %510 = vmatpush1.bf16.msra.mxu0 0
    %511 = vmatprep.subr.bf16.mxu0 0
    %512 = vmatpush1.bf16.msra.mxu0 0
    %513 = vmatprep.subr.bf16.mxu0 0
    %514 = vmatpush1.bf16.msra.mxu0 0
    %515 = vmatprep.subr.bf16.mxu0 0
    %516 = vmatpush1.bf16.msra.mxu0 0
    %517 = vmatprep.subr.bf16.mxu0 0
    %518 = vmatpush1.bf16.msra.mxu0 0
    %519 = vmatprep.subr.bf16.mxu0 0
    %520 = vmatpush1.bf16.msra.mxu0 0
    %521 = vmatprep.subr.bf16.mxu0 0
    %522 = vmatpush1.bf16.msra.mxu0 0
    %523 = vmatprep.mubr.bf16.mxu0 0
    %524 = vmatmul.mubr.bf16.gmra.mrb[0].mxu0 %v366
    %v525 = vpop.f32.mrb[0].mxu0
    %v526 = vadd.f32 %v191, %v525
    %v527 = vpop.f32.mrb[0].mxu0
    %v528 = vadd.f32 %v195, %v527
    %v529 = vpop.f32.mrb[0].mxu0
    %v530 = vpop.f32.mrb[0].mxu0
    %531 = vdwg.mxu0
    %v532 = vmax.f32 %v403, 0.0
    %v533 = vmax.f32 %v405, 0.0
    %v534 = vmax.f32 %v444, 0.0
    %v535 = vmax.f32 %v446, 0.0
    %v536 = vmax.f32 %v485, 0.0
    %v537 = vmax.f32 %v487, 0.0
    %v538 = vmax.f32 %v526, 0.0
    %v539 = vmax.f32 %v528, 0.0
    %v540 = vpack.c.bf16 %v532, %v532
    %v541 = vpack.c.bf16 %v533, %v533
    %v542 = vpack.c.bf16 %v534, %v534
    %v543 = vpack.c.bf16 %v535, %v535
    %v544 = vpack.c.bf16 %v536, %v536
    %v545 = vpack.c.bf16 %v537, %v537
    %v546 = vpack.c.bf16 %v538, %v538
    %v547 = vpack.c.bf16 %v539, %v539
    %v548 = vld [vmem:[#allocation8] sm:$0xff]
    %v549 = vld [vmem:[#allocation8 + $0x8] sm:$0xf]
    %v550 = vld [vmem:[#allocation8 + $0xc] sm:$0xff]
    %v551 = vld [vmem:[#allocation8 + $0x14] sm:$0xf]
    %v552 = vld [vmem:[#allocation8 + $0x18] sm:$0xff]
    %v553 = vld [vmem:[#allocation8 + $0x20] sm:$0xf]
    %v554 = vld [vmem:[#allocation8 + $0x24] sm:$0xff]
    %v555 = vld [vmem:[#allocation8 + $0x2c] sm:$0xf]
    %v556 = vld [vmem:[#allocation8 + $0x30] sm:$0xff]
    %v557 = vld [vmem:[#allocation8 + $0x38] sm:$0xf]
    %v558 = vld [vmem:[#allocation8 + $0x3c] sm:$0xff]
    %v559 = vld [vmem:[#allocation8 + $0x44] sm:$0xf]
    %v560 = vld [vmem:[#allocation8 + $0x48] sm:$0xff]
    %v561 = vld [vmem:[#allocation8 + $0x50] sm:$0xf]
    %v562 = vld [vmem:[#allocation8 + $0x54] sm:$0xff]
    %v563 = vld [vmem:[#allocation8 + $0x5c] sm:$0xf]
    %v564 = vld [vmem:[#allocation8 + $0x60] sm:$0xff]
    %v565 = vld [vmem:[#allocation8 + $0x68] sm:$0xf]
    %v566 = vld [vmem:[#allocation8 + $0x6c] sm:$0xff]
    %v567 = vld [vmem:[#allocation8 + $0x74] sm:$0xf]
    %v568 = vld [vmem:[#allocation8 + $0x78] sm:$0xff]
    %v569 = vld [vmem:[#allocation8 + $0x80] sm:$0xf]
    %v570 = vld [vmem:[#allocation8 + $0x84] sm:$0xff]
    %v571 = vld [vmem:[#allocation8 + $0x8c] sm:$0xf]
    %v572 = vld [vmem:[#allocation8 + $0x90] sm:$0xff]
    %v573 = vld [vmem:[#allocation8 + $0x98] sm:$0xf]
    %v574 = vld [vmem:[#allocation8 + $0x9c] sm:$0xff]
    %v575 = vld [vmem:[#allocation8 + $0xa4] sm:$0xf]
    %v576 = vld [vmem:[#allocation8 + $0xa8] sm:$0xff]
    %v577 = vld [vmem:[#allocation8 + $0xb0] sm:$0xf]
    %v578 = vld [vmem:[#allocation8 + $0xb4] sm:$0xff]
    %v579 = vld [vmem:[#allocation8 + $0xbc] sm:$0xf]
    %v580 = vld [vmem:[#allocation8 + $0xc0] sm:$0xff]
    %v581 = vld [vmem:[#allocation8 + $0xc8] sm:$0xf]
    %v582 = vld [vmem:[#allocation8 + $0xcc] sm:$0xff]
    %v583 = vld [vmem:[#allocation8 + $0xd4] sm:$0xf]
    %v584 = vld [vmem:[#allocation8 + $0xd8] sm:$0xff]
    %v585 = vld [vmem:[#allocation8 + $0xe0] sm:$0xf]
    %v586 = vld [vmem:[#allocation8 + $0xe4] sm:$0xff]
    %v587 = vld [vmem:[#allocation8 + $0xec] sm:$0xf]
    %v588 = vld [vmem:[#allocation8 + $0xf0] sm:$0xff]
    %v589 = vld [vmem:[#allocation8 + $0xf8] sm:$0xf]
    %v590 = vld [vmem:[#allocation8 + $0xfc] sm:$0xff]
    %v591 = vld [vmem:[#allocation8 + $0x104] sm:$0xf]
    %v592 = vld [vmem:[#allocation8 + $0x108] sm:$0xff]
    %v593 = vld [vmem:[#allocation8 + $0x110] sm:$0xf]
    %v594 = vld [vmem:[#allocation8 + $0x114] sm:$0xff]
    %v595 = vld [vmem:[#allocation8 + $0x11c] sm:$0xf]
    %v596 = vld [vmem:[#allocation8 + $0x120] sm:$0xff]
    %v597 = vld [vmem:[#allocation8 + $0x128] sm:$0xf]
    %v598 = vld [vmem:[#allocation8 + $0x12c] sm:$0xff]
    %v599 = vld [vmem:[#allocation8 + $0x134] sm:$0xf]
    %v600 = vld [vmem:[#allocation8 + $0x138] sm:$0xff]
    %v601 = vld [vmem:[#allocation8 + $0x140] sm:$0xf]
    %v602 = vld [vmem:[#allocation8 + $0x144] sm:$0xff]
    %v603 = vld [vmem:[#allocation8 + $0x14c] sm:$0xf]
    %v604 = vld [vmem:[#allocation8 + $0x150] sm:$0xff]
    %v605 = vld [vmem:[#allocation8 + $0x158] sm:$0xf]
    %v606 = vld [vmem:[#allocation8 + $0x15c] sm:$0xff]
    %v607 = vld [vmem:[#allocation8 + $0x164] sm:$0xf]
    %v608 = vld [vmem:[#allocation8 + $0x168] sm:$0xff]
    %v609 = vld [vmem:[#allocation8 + $0x170] sm:$0xf]
    %v610 = vld [vmem:[#allocation8 + $0x174] sm:$0xff]
    %v611 = vld [vmem:[#allocation8 + $0x17c] sm:$0xf]
    %v612 = vld [vmem:[#allocation8 + $0x180] sm:$0xff]
    %v613 = vld [vmem:[#allocation8 + $0x188] sm:$0xf]
    %v614 = vld [vmem:[#allocation8 + $0x18c] sm:$0xff]
    %v615 = vld [vmem:[#allocation8 + $0x194] sm:$0xf]
    %v616 = vld [vmem:[#allocation8 + $0x198] sm:$0xff]
    %v617 = vld [vmem:[#allocation8 + $0x1a0] sm:$0xf]
    %v618 = vld [vmem:[#allocation8 + $0x1a4] sm:$0xff]
    %v619 = vld [vmem:[#allocation8 + $0x1ac] sm:$0xf]
    %v620 = vld [vmem:[#allocation8 + $0x1b0] sm:$0xff]
    %v621 = vld [vmem:[#allocation8 + $0x1b8] sm:$0xf]
    %v622 = vld [vmem:[#allocation8 + $0x1bc] sm:$0xff]
    %v623 = vld [vmem:[#allocation8 + $0x1c4] sm:$0xf]
    %v624 = vld [vmem:[#allocation8 + $0x1c8] sm:$0xff]
    %v625 = vld [vmem:[#allocation8 + $0x1d0] sm:$0xf]
    %v626 = vld [vmem:[#allocation8 + $0x1d4] sm:$0xff]
    %v627 = vld [vmem:[#allocation8 + $0x1dc] sm:$0xf]
    %v628 = vld [vmem:[#allocation8 + $0x1e0] sm:$0xff]
    %v629 = vld [vmem:[#allocation8 + $0x1e8] sm:$0xf]
    %v630 = vld [vmem:[#allocation8 + $0x1ec] sm:$0xff]
    %v631 = vld [vmem:[#allocation8 + $0x1f4] sm:$0xf]
    %v632 = vld [vmem:[#allocation8 + $0x1f8] sm:$0xff]
    %v633 = vld [vmem:[#allocation8 + $0x200] sm:$0xf]
    %v634 = vld [vmem:[#allocation8 + $0x204] sm:$0xff]
    %v635 = vld [vmem:[#allocation8 + $0x20c] sm:$0xf]
    %v636 = vld [vmem:[#allocation8 + $0x210] sm:$0xff]
    %v637 = vld [vmem:[#allocation8 + $0x218] sm:$0xf]
    %v638 = vld [vmem:[#allocation8 + $0x21c] sm:$0xff]
    %v639 = vld [vmem:[#allocation8 + $0x224] sm:$0xf]
    %v640 = vld [vmem:[#allocation8 + $0x228] sm:$0xff]
    %v641 = vld [vmem:[#allocation8 + $0x230] sm:$0xf]
    %v642 = vld [vmem:[#allocation8 + $0x234] sm:$0xff]
    %v643 = vld [vmem:[#allocation8 + $0x23c] sm:$0xf]
    %v644 = vld [vmem:[#allocation8 + $0x240] sm:$0xff]
    %v645 = vld [vmem:[#allocation8 + $0x248] sm:$0xf]
    %v646 = vld [vmem:[#allocation8 + $0x24c] sm:$0xff]
    %v647 = vld [vmem:[#allocation8 + $0x254] sm:$0xf]
    %v648 = vld [vmem:[#allocation8 + $0x258] sm:$0xff]
    %v649 = vld [vmem:[#allocation8 + $0x260] sm:$0xf]
    %v650 = vld [vmem:[#allocation8 + $0x264] sm:$0xff]
    %v651 = vld [vmem:[#allocation8 + $0x26c] sm:$0xf]
    %v652 = vld [vmem:[#allocation8 + $0x270] sm:$0xff]
    %v653 = vld [vmem:[#allocation8 + $0x278] sm:$0xf]
    %v654 = vld [vmem:[#allocation8 + $0x27c] sm:$0xff]
    %v655 = vld [vmem:[#allocation8 + $0x284] sm:$0xf]
    %v656 = vld [vmem:[#allocation8 + $0x288] sm:$0xff]
    %v657 = vld [vmem:[#allocation8 + $0x290] sm:$0xf]
    %v658 = vld [vmem:[#allocation8 + $0x294] sm:$0xff]
    %v659 = vld [vmem:[#allocation8 + $0x29c] sm:$0xf]
    %v660 = vld [vmem:[#allocation8 + $0x2a0] sm:$0xff]
    %v661 = vld [vmem:[#allocation8 + $0x2a8] sm:$0xf]
    %v662 = vld [vmem:[#allocation8 + $0x2ac] sm:$0xff]
    %v663 = vld [vmem:[#allocation8 + $0x2b4] sm:$0xf]
    %v664 = vld [vmem:[#allocation8 + $0x2b8] sm:$0xff]
    %v665 = vld [vmem:[#allocation8 + $0x2c0] sm:$0xf]
    %v666 = vld [vmem:[#allocation8 + $0x2c4] sm:$0xff]
    %v667 = vld [vmem:[#allocation8 + $0x2cc] sm:$0xf]
    %v668 = vld [vmem:[#allocation8 + $0x2d0] sm:$0xff]
    %v669 = vld [vmem:[#allocation8 + $0x2d8] sm:$0xf]
    %v670 = vld [vmem:[#allocation8 + $0x2dc] sm:$0xff]
    %v671 = vld [vmem:[#allocation8 + $0x2e4] sm:$0xf]
    %v672 = vld [vmem:[#allocation8 + $0x2e8] sm:$0xff]
    %v673 = vld [vmem:[#allocation8 + $0x2f0] sm:$0xf]
    %v674 = vld [vmem:[#allocation8 + $0x2f4] sm:$0xff]
    %v675 = vld [vmem:[#allocation8 + $0x2fc] sm:$0xf]
    %v676 = vld [vmem:[%s4] sm:$0x7]
    %v678 = vlaneseq
    %v679 = vshrl.u32 %v678, 7
    %v680 = vsub.s32 0, %v679
    %v681 = vrot.slane %v676, %v680
    %v682 = vlaneseq
    %v683 = vshrl.u32 %v682, 7
    %v684 = vsub.s32 1, %v683
    %v685 = vrot.slane %v676, %v684
    %v686 = vlaneseq
    %v687 = vshrl.u32 %v686, 7
    %v688 = vsub.s32 2, %v687
    %v689 = vrot.slane %v676, %v688
    %v821 = vunpack.c.l.b16 %v548
    %v822 = vunpack.c.h.b16 %v548
    %v823 = vunpack.c.l.b16 %v549
    %v824 = vunpack.c.l.b16 %v550
    %v825 = vunpack.c.h.b16 %v550
    %v826 = vunpack.c.l.b16 %v551
    %v827 = vunpack.c.l.b16 %v552
    %v828 = vunpack.c.h.b16 %v552
    %v829 = vunpack.c.l.b16 %v553
    %v830 = vunpack.c.l.b16 %v554
    %v831 = vunpack.c.h.b16 %v554
    %v832 = vunpack.c.l.b16 %v555
    %v833 = vunpack.c.l.b16 %v556
    %v834 = vunpack.c.h.b16 %v556
    %v835 = vunpack.c.l.b16 %v557
    %v836 = vunpack.c.l.b16 %v558
    %v837 = vunpack.c.h.b16 %v558
    %v838 = vunpack.c.l.b16 %v559
    %v839 = vunpack.c.l.b16 %v560
    %v840 = vunpack.c.h.b16 %v560
    %v841 = vunpack.c.l.b16 %v561
    %v842 = vunpack.c.l.b16 %v562
    %v843 = vunpack.c.h.b16 %v562
    %v844 = vunpack.c.l.b16 %v563
    %v845 = vunpack.c.l.b16 %v564
    %v846 = vunpack.c.h.b16 %v564
    %v847 = vunpack.c.l.b16 %v565
    %v848 = vunpack.c.l.b16 %v566
    %v849 = vunpack.c.h.b16 %v566
    %v850 = vunpack.c.l.b16 %v567
    %v851 = vunpack.c.l.b16 %v568
    %v852 = vunpack.c.h.b16 %v568
    %v853 = vunpack.c.l.b16 %v569
    %v854 = vunpack.c.l.b16 %v570
    %v855 = vunpack.c.h.b16 %v570
    %v856 = vunpack.c.l.b16 %v571
    %v857 = vunpack.c.l.b16 %v572
    %v858 = vunpack.c.h.b16 %v572
    %v859 = vunpack.c.l.b16 %v573
    %v860 = vunpack.c.l.b16 %v574
    %v861 = vunpack.c.h.b16 %v574
    %v862 = vunpack.c.l.b16 %v575
    %v863 = vunpack.c.l.b16 %v576
    %v864 = vunpack.c.h.b16 %v576
    %v865 = vunpack.c.l.b16 %v577
    %v866 = vunpack.c.l.b16 %v578
    %v867 = vunpack.c.h.b16 %v578
    %v868 = vunpack.c.l.b16 %v579
    %v869 = vunpack.c.l.b16 %v580
    %v870 = vunpack.c.h.b16 %v580
    %v871 = vunpack.c.l.b16 %v581
    %v872 = vunpack.c.l.b16 %v582
    %v873 = vunpack.c.h.b16 %v582
    %v874 = vunpack.c.l.b16 %v583
    %v875 = vunpack.c.l.b16 %v584
    %v876 = vunpack.c.h.b16 %v584
    %v877 = vunpack.c.l.b16 %v585
    %v878 = vunpack.c.l.b16 %v586
    %v879 = vunpack.c.h.b16 %v586
    %v880 = vunpack.c.l.b16 %v587
    %v881 = vunpack.c.l.b16 %v588
    %v882 = vunpack.c.h.b16 %v588
    %v883 = vunpack.c.l.b16 %v589
    %v884 = vunpack.c.l.b16 %v590
    %v885 = vunpack.c.h.b16 %v590
    %v886 = vunpack.c.l.b16 %v591
    %v887 = vunpack.c.l.b16 %v592
    %v888 = vunpack.c.h.b16 %v592
    %v889 = vunpack.c.l.b16 %v593
    %v890 = vunpack.c.l.b16 %v594
    %v891 = vunpack.c.h.b16 %v594
    %v892 = vunpack.c.l.b16 %v595
    %v893 = vunpack.c.l.b16 %v596
    %v894 = vunpack.c.h.b16 %v596
    %v895 = vunpack.c.l.b16 %v597
    %v896 = vunpack.c.l.b16 %v598
    %v897 = vunpack.c.h.b16 %v598
    %v898 = vunpack.c.l.b16 %v599
    %v899 = vunpack.c.l.b16 %v600
    %v900 = vunpack.c.h.b16 %v600
    %v901 = vunpack.c.l.b16 %v601
    %v902 = vunpack.c.l.b16 %v602
    %v903 = vunpack.c.h.b16 %v602
    %v904 = vunpack.c.l.b16 %v603
    %v905 = vunpack.c.l.b16 %v604
    %v906 = vunpack.c.h.b16 %v604
    %v907 = vunpack.c.l.b16 %v605
    %v908 = vunpack.c.l.b16 %v606
    %v909 = vunpack.c.h.b16 %v606
    %v910 = vunpack.c.l.b16 %v607
    %v911 = vunpack.c.l.b16 %v608
    %v912 = vunpack.c.h.b16 %v608
    %v913 = vunpack.c.l.b16 %v609
    %v914 = vunpack.c.l.b16 %v610
    %v915 = vunpack.c.h.b16 %v610
    %v916 = vunpack.c.l.b16 %v611
    %v917 = vunpack.c.l.b16 %v612
    %v918 = vunpack.c.h.b16 %v612
    %v919 = vunpack.c.l.b16 %v613
    %v920 = vunpack.c.l.b16 %v614
    %v921 = vunpack.c.h.b16 %v614
    %v922 = vunpack.c.l.b16 %v615
    %v923 = vunpack.c.l.b16 %v616
    %v924 = vunpack.c.h.b16 %v616
    %v925 = vunpack.c.l.b16 %v617
    %v926 = vunpack.c.l.b16 %v618
    %v927 = vunpack.c.h.b16 %v618
    %v928 = vunpack.c.l.b16 %v619
    %v929 = vunpack.c.l.b16 %v620
    %v930 = vunpack.c.h.b16 %v620
    %v931 = vunpack.c.l.b16 %v621
    %v932 = vunpack.c.l.b16 %v622
    %v933 = vunpack.c.h.b16 %v622
    %v934 = vunpack.c.l.b16 %v623
    %v935 = vunpack.c.l.b16 %v624
    %v936 = vunpack.c.h.b16 %v624
    %v937 = vunpack.c.l.b16 %v625
    %v938 = vunpack.c.l.b16 %v626
    %v939 = vunpack.c.h.b16 %v626
    %v940 = vunpack.c.l.b16 %v627
    %v941 = vunpack.c.l.b16 %v628
    %v942 = vunpack.c.h.b16 %v628
    %v943 = vunpack.c.l.b16 %v629
    %v944 = vunpack.c.l.b16 %v630
    %v945 = vunpack.c.h.b16 %v630
    %v946 = vunpack.c.l.b16 %v631
    %v947 = vunpack.c.l.b16 %v632
    %v948 = vunpack.c.h.b16 %v632
    %v949 = vunpack.c.l.b16 %v633
    %v950 = vunpack.c.l.b16 %v634
    %v951 = vunpack.c.h.b16 %v634
    %v952 = vunpack.c.l.b16 %v635
    %v953 = vunpack.c.l.b16 %v636
    %v954 = vunpack.c.h.b16 %v636
    %v955 = vunpack.c.l.b16 %v637
    %v956 = vunpack.c.l.b16 %v638
    %v957 = vunpack.c.h.b16 %v638
    %v958 = vunpack.c.l.b16 %v639
    %v959 = vunpack.c.l.b16 %v640
    %v960 = vunpack.c.h.b16 %v640
    %v961 = vunpack.c.l.b16 %v641
    %v962 = vunpack.c.l.b16 %v642
    %v963 = vunpack.c.h.b16 %v642
    %v964 = vunpack.c.l.b16 %v643
    %v965 = vunpack.c.l.b16 %v644
    %v966 = vunpack.c.h.b16 %v644
    %v967 = vunpack.c.l.b16 %v645
    %v968 = vunpack.c.l.b16 %v646
    %v969 = vunpack.c.h.b16 %v646
    %v970 = vunpack.c.l.b16 %v647
    %v971 = vunpack.c.l.b16 %v648
    %v972 = vunpack.c.h.b16 %v648
    %v973 = vunpack.c.l.b16 %v649
    %v974 = vunpack.c.l.b16 %v650
    %v975 = vunpack.c.h.b16 %v650
    %v976 = vunpack.c.l.b16 %v651
    %v977 = vunpack.c.l.b16 %v652
    %v978 = vunpack.c.h.b16 %v652
    %v979 = vunpack.c.l.b16 %v653
    %v980 = vunpack.c.l.b16 %v654
    %v981 = vunpack.c.h.b16 %v654
    %v982 = vunpack.c.l.b16 %v655
    %v983 = vunpack.c.l.b16 %v656
    %v984 = vunpack.c.h.b16 %v656
    %v985 = vunpack.c.l.b16 %v657
    %v986 = vunpack.c.l.b16 %v658
    %v987 = vunpack.c.h.b16 %v658
    %v988 = vunpack.c.l.b16 %v659
    %v989 = vunpack.c.l.b16 %v660
    %v990 = vunpack.c.h.b16 %v660
    %v991 = vunpack.c.l.b16 %v661
    %v992 = vunpack.c.l.b16 %v662
    %v993 = vunpack.c.h.b16 %v662
    %v994 = vunpack.c.l.b16 %v663
    %v995 = vunpack.c.l.b16 %v664
    %v996 = vunpack.c.h.b16 %v664
    %v997 = vunpack.c.l.b16 %v665
    %v998 = vunpack.c.l.b16 %v666
    %v999 = vunpack.c.h.b16 %v666
    %v1000 = vunpack.c.l.b16 %v667
    %v1001 = vunpack.c.l.b16 %v668
    %v1002 = vunpack.c.h.b16 %v668
    %v1003 = vunpack.c.l.b16 %v669
    %v1004 = vunpack.c.l.b16 %v670
    %v1005 = vunpack.c.h.b16 %v670
    %v1006 = vunpack.c.l.b16 %v671
    %v1007 = vunpack.c.l.b16 %v672
    %v1008 = vunpack.c.h.b16 %v672
    %v1009 = vunpack.c.l.b16 %v673
    %v1010 = vunpack.c.l.b16 %v674
    %v1011 = vunpack.c.h.b16 %v674
    %v1012 = vunpack.c.l.b16 %v675
    %v1013 = vpack.c.b16 %v824, %v821
    %v1014 = vpack.c.b16 %v825, %v822
    %v1015 = vpack.c.b16 %v826, %v823
    %v1016 = vpack.c.b16 %v830, %v827
    %v1017 = vpack.c.b16 %v831, %v828
    %v1018 = vpack.c.b16 %v832, %v829
    %v1019 = vpack.c.b16 %v836, %v833
    %v1020 = vpack.c.b16 %v837, %v834
    %v1021 = vpack.c.b16 %v838, %v835
    %v1022 = vpack.c.b16 %v842, %v839
    %v1023 = vpack.c.b16 %v843, %v840
    %v1024 = vpack.c.b16 %v844, %v841
    %v1025 = vpack.c.b16 %v848, %v845
    %v1026 = vpack.c.b16 %v849, %v846
    %v1027 = vpack.c.b16 %v850, %v847
    %v1028 = vpack.c.b16 %v854, %v851
    %v1029 = vpack.c.b16 %v855, %v852
    %v1030 = vpack.c.b16 %v856, %v853
    %v1031 = vpack.c.b16 %v860, %v857
    %v1032 = vpack.c.b16 %v861, %v858
    %v1033 = vpack.c.b16 %v862, %v859
    %v1034 = vpack.c.b16 %v866, %v863
    %v1035 = vpack.c.b16 %v867, %v864
    %v1036 = vpack.c.b16 %v868, %v865
    %v1037 = vpack.c.b16 %v872, %v869
    %v1038 = vpack.c.b16 %v873, %v870
    %v1039 = vpack.c.b16 %v874, %v871
    %v1040 = vpack.c.b16 %v878, %v875
    %v1041 = vpack.c.b16 %v879, %v876
    %v1042 = vpack.c.b16 %v880, %v877
    %v1043 = vpack.c.b16 %v884, %v881
    %v1044 = vpack.c.b16 %v885, %v882
    %v1045 = vpack.c.b16 %v886, %v883
    %v1046 = vpack.c.b16 %v890, %v887
    %v1047 = vpack.c.b16 %v891, %v888
    %v1048 = vpack.c.b16 %v892, %v889
    %v1049 = vpack.c.b16 %v896, %v893
    %v1050 = vpack.c.b16 %v897, %v894
    %v1051 = vpack.c.b16 %v898, %v895
    %v1052 = vpack.c.b16 %v902, %v899
    %v1053 = vpack.c.b16 %v903, %v900
    %v1054 = vpack.c.b16 %v904, %v901
    %v1055 = vpack.c.b16 %v908, %v905
    %v1056 = vpack.c.b16 %v909, %v906
    %v1057 = vpack.c.b16 %v910, %v907
    %v1058 = vpack.c.b16 %v914, %v911
    %v1059 = vpack.c.b16 %v915, %v912
    %v1060 = vpack.c.b16 %v916, %v913
    %v1061 = vpack.c.b16 %v920, %v917
    %v1062 = vpack.c.b16 %v921, %v918
    %v1063 = vpack.c.b16 %v922, %v919
    %v1064 = vpack.c.b16 %v926, %v923
    %v1065 = vpack.c.b16 %v927, %v924
    %v1066 = vpack.c.b16 %v928, %v925
    %v1067 = vpack.c.b16 %v932, %v929
    %v1068 = vpack.c.b16 %v933, %v930
    %v1069 = vpack.c.b16 %v934, %v931
    %v1070 = vpack.c.b16 %v938, %v935
    %v1071 = vpack.c.b16 %v939, %v936
    %v1072 = vpack.c.b16 %v940, %v937
    %v1073 = vpack.c.b16 %v944, %v941
    %v1074 = vpack.c.b16 %v945, %v942
    %v1075 = vpack.c.b16 %v946, %v943
    %v1076 = vpack.c.b16 %v950, %v947
    %v1077 = vpack.c.b16 %v951, %v948
    %v1078 = vpack.c.b16 %v952, %v949
    %v1079 = vpack.c.b16 %v956, %v953
    %v1080 = vpack.c.b16 %v957, %v954
    %v1081 = vpack.c.b16 %v958, %v955
    %v1082 = vpack.c.b16 %v962, %v959
    %v1083 = vpack.c.b16 %v963, %v960
    %v1084 = vpack.c.b16 %v964, %v961
    %v1085 = vpack.c.b16 %v968, %v965
    %v1086 = vpack.c.b16 %v969, %v966
    %v1087 = vpack.c.b16 %v970, %v967
    %v1088 = vpack.c.b16 %v974, %v971
    %v1089 = vpack.c.b16 %v975, %v972
    %v1090 = vpack.c.b16 %v976, %v973
    %v1091 = vpack.c.b16 %v980, %v977
    %v1092 = vpack.c.b16 %v981, %v978
    %v1093 = vpack.c.b16 %v982, %v979
    %v1094 = vpack.c.b16 %v986, %v983
    %v1095 = vpack.c.b16 %v987, %v984
    %v1096 = vpack.c.b16 %v988, %v985
    %v1097 = vpack.c.b16 %v992, %v989
    %v1098 = vpack.c.b16 %v993, %v990
    %v1099 = vpack.c.b16 %v994, %v991
    %v1100 = vpack.c.b16 %v998, %v995
    %v1101 = vpack.c.b16 %v999, %v996
    %v1102 = vpack.c.b16 %v1000, %v997
    %v1103 = vpack.c.b16 %v1004, %v1001
    %v1104 = vpack.c.b16 %v1005, %v1002
    %v1105 = vpack.c.b16 %v1006, %v1003
    %v1106 = vpack.c.b16 %v1010, %v1007
    %v1107 = vpack.c.b16 %v1011, %v1008
    %v1108 = vpack.c.b16 %v1012, %v1009
    %1205 = vmatprep.subr.bf16.mxu0 %v1014
    %1206 = vmatpush1.bf16.msra.mxu0 %v1013
    %1207 = vmatprep.subr.bf16.mxu0 %v1017
    %1208 = vmatpush1.bf16.msra.mxu0 %v1016
    %1209 = vmatprep.subr.bf16.mxu0 %v1020
    %1210 = vmatpush1.bf16.msra.mxu0 %v1019
    %1211 = vmatprep.subr.bf16.mxu0 %v1023
    %1212 = vmatpush1.bf16.msra.mxu0 %v1022
    %1213 = vmatprep.subr.bf16.mxu0 %v1026
    %1214 = vmatpush1.bf16.msra.mxu0 %v1025
    %1215 = vmatprep.subr.bf16.mxu0 %v1029
    %1216 = vmatpush1.bf16.msra.mxu0 %v1028
    %1217 = vmatprep.subr.bf16.mxu0 %v1032
    %1218 = vmatpush1.bf16.msra.mxu0 %v1031
    %1219 = vmatprep.subr.bf16.mxu0 %v1035
    %1220 = vmatpush1.bf16.msra.mxu0 %v1034
    %1221 = vmatprep.subr.bf16.mxu0 %v1038
    %1222 = vmatpush1.bf16.msra.mxu0 %v1037
    %1223 = vmatprep.subr.bf16.mxu0 %v1041
    %1224 = vmatpush1.bf16.msra.mxu0 %v1040
    %1225 = vmatprep.subr.bf16.mxu0 %v1044
    %1226 = vmatpush1.bf16.msra.mxu0 %v1043
    %1227 = vmatprep.subr.bf16.mxu0 %v1047
    %1228 = vmatpush1.bf16.msra.mxu0 %v1046
    %1229 = vmatprep.subr.bf16.mxu0 %v1050
    %1230 = vmatpush1.bf16.msra.mxu0 %v1049
    %1231 = vmatprep.subr.bf16.mxu0 %v1053
    %1232 = vmatpush1.bf16.msra.mxu0 %v1052
    %1233 = vmatprep.subr.bf16.mxu0 %v1056
    %1234 = vmatpush1.bf16.msra.mxu0 %v1055
    %1235 = vmatprep.subr.bf16.mxu0 %v1059
    %1236 = vmatpush1.bf16.msra.mxu0 %v1058
    %1237 = vmatprep.mubr.bf16.mxu0 %v541
    %1238 = vmatmul.mubr.bf16.gmra.mrb[0].mxu0 %v540
    %v1239 = vpop.f32.mrb[0].mxu0
    %v1240 = vadd.f32 %v681, %v1239
    %v1241 = vpop.f32.mrb[0].mxu0
    %v1242 = vadd.f32 %v685, %v1241
    %v1243 = vpop.f32.mrb[0].mxu0
    %v1244 = vpop.f32.mrb[0].mxu0
    %1245 = vdwg.mxu0
    %1246 = vmatprep.subr.bf16.mxu0 %v1062
    %1247 = vmatpush1.bf16.msra.mxu0 %v1061
    %1248 = vmatprep.subr.bf16.mxu0 %v1065
    %1249 = vmatpush1.bf16.msra.mxu0 %v1064
    %1250 = vmatprep.subr.bf16.mxu0 %v1068
    %1251 = vmatpush1.bf16.msra.mxu0 %v1067
    %1252 = vmatprep.subr.bf16.mxu0 %v1071
    %1253 = vmatpush1.bf16.msra.mxu0 %v1070
    %1254 = vmatprep.subr.bf16.mxu0 %v1074
    %1255 = vmatpush1.bf16.msra.mxu0 %v1073
    %1256 = vmatprep.subr.bf16.mxu0 %v1077
    %1257 = vmatpush1.bf16.msra.mxu0 %v1076
    %1258 = vmatprep.subr.bf16.mxu0 %v1080
    %1259 = vmatpush1.bf16.msra.mxu0 %v1079
    %1260 = vmatprep.subr.bf16.mxu0 %v1083
    %1261 = vmatpush1.bf16.msra.mxu0 %v1082
    %1262 = vmatprep.subr.bf16.mxu0 %v1086
    %1263 = vmatpush1.bf16.msra.mxu0 %v1085
    %1264 = vmatprep.subr.bf16.mxu0 %v1089
    %1265 = vmatpush1.bf16.msra.mxu0 %v1088
    %1266 = vmatprep.subr.bf16.mxu0 %v1092
    %1267 = vmatpush1.bf16.msra.mxu0 %v1091
    %1268 = vmatprep.subr.bf16.mxu0 %v1095
    %1269 = vmatpush1.bf16.msra.mxu0 %v1094
    %1270 = vmatprep.subr.bf16.mxu0 %v1098
    %1271 = vmatpush1.bf16.msra.mxu0 %v1097
    %1272 = vmatprep.subr.bf16.mxu0 %v1101
    %1273 = vmatpush1.bf16.msra.mxu0 %v1100
    %1274 = vmatprep.subr.bf16.mxu0 %v1104
    %1275 = vmatpush1.bf16.msra.mxu0 %v1103
    %1276 = vmatprep.subr.bf16.mxu0 %v1107
    %1277 = vmatpush1.bf16.msra.mxu0 %v1106
    %1278 = vmatprep.mubr.bf16.mxu0 %v543
    %1279 = vmatmul.mubr.bf16.gmra.mrb[0].mxu0 %v542
    %v1280 = vpop.f32.mrb[0].mxu0
    %v1281 = vadd.f32 %v1240, %v1280
    %v1282 = vpop.f32.mrb[0].mxu0
    %v1283 = vadd.f32 %v1242, %v1282
    %v1284 = vpop.f32.mrb[0].mxu0
    %v1285 = vpop.f32.mrb[0].mxu0
    %1286 = vdwg.mxu0
    %1287 = vmatprep.subr.bf16.mxu0 0
    %1288 = vmatpush1.bf16.msra.mxu0 %v1015
    %1289 = vmatprep.subr.bf16.mxu0 0
    %1290 = vmatpush1.bf16.msra.mxu0 %v1018
    %1291 = vmatprep.subr.bf16.mxu0 0
    %1292 = vmatpush1.bf16.msra.mxu0 %v1021
    %1293 = vmatprep.subr.bf16.mxu0 0
    %1294 = vmatpush1.bf16.msra.mxu0 %v1024
    %1295 = vmatprep.subr.bf16.mxu0 0
    %1296 = vmatpush1.bf16.msra.mxu0 %v1027
    %1297 = vmatprep.subr.bf16.mxu0 0
    %1298 = vmatpush1.bf16.msra.mxu0 %v1030
    %1299 = vmatprep.subr.bf16.mxu0 0
    %1300 = vmatpush1.bf16.msra.mxu0 %v1033
    %1301 = vmatprep.subr.bf16.mxu0 0
    %1302 = vmatpush1.bf16.msra.mxu0 %v1036
    %1303 = vmatprep.subr.bf16.mxu0 0
    %1304 = vmatpush1.bf16.msra.mxu0 %v1039
    %1305 = vmatprep.subr.bf16.mxu0 0
    %1306 = vmatpush1.bf16.msra.mxu0 %v1042
    %1307 = vmatprep.subr.bf16.mxu0 0
    %1308 = vmatpush1.bf16.msra.mxu0 %v1045
    %1309 = vmatprep.subr.bf16.mxu0 0
    %1310 = vmatpush1.bf16.msra.mxu0 %v1048
    %1311 = vmatprep.subr.bf16.mxu0 0
    %1312 = vmatpush1.bf16.msra.mxu0 %v1051
    %1313 = vmatprep.subr.bf16.mxu0 0
    %1314 = vmatpush1.bf16.msra.mxu0 %v1054
    %1315 = vmatprep.subr.bf16.mxu0 0
    %1316 = vmatpush1.bf16.msra.mxu0 %v1057
    %1317 = vmatprep.subr.bf16.mxu0 0
    %1318 = vmatpush1.bf16.msra.mxu0 %v1060
    %1319 = vmatprep.mubr.bf16.mxu0 %v541
    %1320 = vmatmul.mubr.bf16.gmra.mrb[0].mxu0 %v540
    %v1321 = vpop.f32.mrb[0].mxu0
    %v1322 = vadd.f32 %v689, %v1321
    %v1323 = vpop.f32.mrb[0].mxu0
    %v1324 = vpop.f32.mrb[0].mxu0
    %v1325 = vpop.f32.mrb[0].mxu0
    %1326 = vdwg.mxu0
    %1327 = vmatprep.subr.bf16.mxu0 0
    %1328 = vmatpush1.bf16.msra.mxu0 %v1063
    %1329 = vmatprep.subr.bf16.mxu0 0
    %1330 = vmatpush1.bf16.msra.mxu0 %v1066
    %1331 = vmatprep.subr.bf16.mxu0 0
    %1332 = vmatpush1.bf16.msra.mxu0 %v1069
    %1333 = vmatprep.subr.bf16.mxu0 0
    %1334 = vmatpush1.bf16.msra.mxu0 %v1072
    %1335 = vmatprep.subr.bf16.mxu0 0
    %1336 = vmatpush1.bf16.msra.mxu0 %v1075
    %1337 = vmatprep.subr.bf16.mxu0 0
    %1338 = vmatpush1.bf16.msra.mxu0 %v1078
    %1339 = vmatprep.subr.bf16.mxu0 0
    %1340 = vmatpush1.bf16.msra.mxu0 %v1081
    %1341 = vmatprep.subr.bf16.mxu0 0
    %1342 = vmatpush1.bf16.msra.mxu0 %v1084
    %1343 = vmatprep.subr.bf16.mxu0 0
    %1344 = vmatpush1.bf16.msra.mxu0 %v1087
    %1345 = vmatprep.subr.bf16.mxu0 0
    %1346 = vmatpush1.bf16.msra.mxu0 %v1090
    %1347 = vmatprep.subr.bf16.mxu0 0
    %1348 = vmatpush1.bf16.msra.mxu0 %v1093
    %1349 = vmatprep.subr.bf16.mxu0 0
    %1350 = vmatpush1.bf16.msra.mxu0 %v1096
    %1351 = vmatprep.subr.bf16.mxu0 0
    %1352 = vmatpush1.bf16.msra.mxu0 %v1099
    %1353 = vmatprep.subr.bf16.mxu0 0
    %1354 = vmatpush1.bf16.msra.mxu0 %v1102
    %1355 = vmatprep.subr.bf16.mxu0 0
    %1356 = vmatpush1.bf16.msra.mxu0 %v1105
    %1357 = vmatprep.subr.bf16.mxu0 0
    %1358 = vmatpush1.bf16.msra.mxu0 %v1108
    %1359 = vmatprep.mubr.bf16.mxu0 %v543
    %1360 = vmatmul.mubr.bf16.gmra.mrb[0].mxu0 %v542
    %v1361 = vpop.f32.mrb[0].mxu0
    %v1362 = vadd.f32 %v1322, %v1361
    %v1363 = vpop.f32.mrb[0].mxu0
    %v1364 = vpop.f32.mrb[0].mxu0
    %v1365 = vpop.f32.mrb[0].mxu0
    %1366 = vdwg.mxu0
    %v1367 = vmax.f32 %v1281, 0.0
    %v1368 = vmax.f32 %v1283, 0.0
    %v1369 = vmax.f32 %v1362, 0.0
    %v1370 = vld [vmem:[#allocation10] sm:$0xff]
    %v1371 = vld [vmem:[#allocation10 + $0x8] sm:$0xf]
    %v1372 = vld [vmem:[#allocation10 + $0xc] sm:$0xff]
    %v1373 = vld [vmem:[#allocation10 + $0x14] sm:$0xf]
    %v1374 = vld [vmem:[#allocation10 + $0x18] sm:$0xff]
    %v1375 = vld [vmem:[#allocation10 + $0x20] sm:$0xf]
    %v1376 = vld [vmem:[#allocation10 + $0x24] sm:$0xff]
    %v1377 = vld [vmem:[#allocation10 + $0x2c] sm:$0xf]
    %v1378 = vld [vmem:[#allocation10 + $0x30] sm:$0xff]
    %v1379 = vld [vmem:[#allocation10 + $0x38] sm:$0xf]
    %v1380 = vld [vmem:[#allocation10 + $0x3c] sm:$0xff]
    %v1381 = vld [vmem:[#allocation10 + $0x44] sm:$0xf]
    %v1382 = vld [vmem:[#allocation10 + $0x48] sm:$0xff]
    %v1383 = vld [vmem:[#allocation10 + $0x50] sm:$0xf]
    %v1384 = vld [vmem:[#allocation10 + $0x54] sm:$0xff]
    %v1385 = vld [vmem:[#allocation10 + $0x5c] sm:$0xf]
    %v1386 = vld [vmem:[#allocation10 + $0x60] sm:$0xff]
    %v1387 = vld [vmem:[#allocation10 + $0x68] sm:$0xf]
    %v1388 = vld [vmem:[#allocation10 + $0x6c] sm:$0xff]
    %v1389 = vld [vmem:[#allocation10 + $0x74] sm:$0xf]
    %v1390 = vld [vmem:[#allocation10 + $0x78] sm:$0xff]
    %v1391 = vld [vmem:[#allocation10 + $0x80] sm:$0xf]
    %v1392 = vld [vmem:[#allocation10 + $0x84] sm:$0xff]
    %v1393 = vld [vmem:[#allocation10 + $0x8c] sm:$0xf]
    %v1394 = vld [vmem:[#allocation10 + $0x90] sm:$0xff]
    %v1395 = vld [vmem:[#allocation10 + $0x98] sm:$0xf]
    %v1396 = vld [vmem:[#allocation10 + $0x9c] sm:$0xff]
    %v1397 = vld [vmem:[#allocation10 + $0xa4] sm:$0xf]
    %v1398 = vld [vmem:[#allocation10 + $0xa8] sm:$0xff]
    %v1399 = vld [vmem:[#allocation10 + $0xb0] sm:$0xf]
    %v1400 = vld [vmem:[#allocation10 + $0xb4] sm:$0xff]
    %v1401 = vld [vmem:[#allocation10 + $0xbc] sm:$0xf]
    %v1402 = vld [vmem:[#allocation10 + $0xc0] sm:$0xff]
    %v1403 = vld [vmem:[#allocation10 + $0xc8] sm:$0xf]
    %v1404 = vld [vmem:[#allocation10 + $0xcc] sm:$0xff]
    %v1405 = vld [vmem:[#allocation10 + $0xd4] sm:$0xf]
    %v1406 = vld [vmem:[#allocation10 + $0xd8] sm:$0xff]
    %v1407 = vld [vmem:[#allocation10 + $0xe0] sm:$0xf]
    %v1408 = vld [vmem:[#allocation10 + $0xe4] sm:$0xff]
    %v1409 = vld [vmem:[#allocation10 + $0xec] sm:$0xf]
    %v1410 = vld [vmem:[#allocation10 + $0xf0] sm:$0xff]
    %v1411 = vld [vmem:[#allocation10 + $0xf8] sm:$0xf]
    %v1412 = vld [vmem:[#allocation10 + $0xfc] sm:$0xff]
    %v1413 = vld [vmem:[#allocation10 + $0x104] sm:$0xf]
    %v1414 = vld [vmem:[#allocation10 + $0x108] sm:$0xff]
    %v1415 = vld [vmem:[#allocation10 + $0x110] sm:$0xf]
    %v1416 = vld [vmem:[#allocation10 + $0x114] sm:$0xff]
    %v1417 = vld [vmem:[#allocation10 + $0x11c] sm:$0xf]
    %v1418 = vld [vmem:[#allocation10 + $0x120] sm:$0xff]
    %v1419 = vld [vmem:[#allocation10 + $0x128] sm:$0xf]
    %v1420 = vld [vmem:[#allocation10 + $0x12c] sm:$0xff]
    %v1421 = vld [vmem:[#allocation10 + $0x134] sm:$0xf]
    %v1422 = vld [vmem:[#allocation10 + $0x138] sm:$0xff]
    %v1423 = vld [vmem:[#allocation10 + $0x140] sm:$0xf]
    %v1424 = vld [vmem:[#allocation10 + $0x144] sm:$0xff]
    %v1425 = vld [vmem:[#allocation10 + $0x14c] sm:$0xf]
    %v1426 = vld [vmem:[#allocation10 + $0x150] sm:$0xff]
    %v1427 = vld [vmem:[#allocation10 + $0x158] sm:$0xf]
    %v1428 = vld [vmem:[#allocation10 + $0x15c] sm:$0xff]
    %v1429 = vld [vmem:[#allocation10 + $0x164] sm:$0xf]
    %v1430 = vld [vmem:[#allocation10 + $0x168] sm:$0xff]
    %v1431 = vld [vmem:[#allocation10 + $0x170] sm:$0xf]
    %v1432 = vld [vmem:[#allocation10 + $0x174] sm:$0xff]
    %v1433 = vld [vmem:[#allocation10 + $0x17c] sm:$0xf]
    %v1434 = vld [vmem:[#allocation10 + $0x180] sm:$0xff]
    %v1435 = vld [vmem:[#allocation10 + $0x188] sm:$0xf]
    %v1436 = vld [vmem:[#allocation10 + $0x18c] sm:$0xff]
    %v1437 = vld [vmem:[#allocation10 + $0x194] sm:$0xf]
    %v1438 = vld [vmem:[#allocation10 + $0x198] sm:$0xff]
    %v1439 = vld [vmem:[#allocation10 + $0x1a0] sm:$0xf]
    %v1440 = vld [vmem:[#allocation10 + $0x1a4] sm:$0xff]
    %v1441 = vld [vmem:[#allocation10 + $0x1ac] sm:$0xf]
    %v1442 = vld [vmem:[#allocation10 + $0x1b0] sm:$0xff]
    %v1443 = vld [vmem:[#allocation10 + $0x1b8] sm:$0xf]
    %v1444 = vld [vmem:[#allocation10 + $0x1bc] sm:$0xff]
    %v1445 = vld [vmem:[#allocation10 + $0x1c4] sm:$0xf]
    %v1446 = vld [vmem:[#allocation10 + $0x1c8] sm:$0xff]
    %v1447 = vld [vmem:[#allocation10 + $0x1d0] sm:$0xf]
    %v1448 = vld [vmem:[#allocation10 + $0x1d4] sm:$0xff]
    %v1449 = vld [vmem:[#allocation10 + $0x1dc] sm:$0xf]
    %v1450 = vld [vmem:[#allocation10 + $0x1e0] sm:$0xff]
    %v1451 = vld [vmem:[#allocation10 + $0x1e8] sm:$0xf]
    %v1452 = vld [vmem:[#allocation10 + $0x1ec] sm:$0xff]
    %v1453 = vld [vmem:[#allocation10 + $0x1f4] sm:$0xf]
    %v1454 = vld [vmem:[#allocation10 + $0x1f8] sm:$0xff]
    %v1455 = vld [vmem:[#allocation10 + $0x200] sm:$0xf]
    %v1456 = vld [vmem:[#allocation10 + $0x204] sm:$0xff]
    %v1457 = vld [vmem:[#allocation10 + $0x20c] sm:$0xf]
    %v1458 = vld [vmem:[#allocation10 + $0x210] sm:$0xff]
    %v1459 = vld [vmem:[#allocation10 + $0x218] sm:$0xf]
    %v1460 = vld [vmem:[#allocation10 + $0x21c] sm:$0xff]
    %v1461 = vld [vmem:[#allocation10 + $0x224] sm:$0xf]
    %v1462 = vld [vmem:[#allocation10 + $0x228] sm:$0xff]
    %v1463 = vld [vmem:[#allocation10 + $0x230] sm:$0xf]
    %v1464 = vld [vmem:[#allocation10 + $0x234] sm:$0xff]
    %v1465 = vld [vmem:[#allocation10 + $0x23c] sm:$0xf]
    %v1466 = vld [vmem:[#allocation10 + $0x240] sm:$0xff]
    %v1467 = vld [vmem:[#allocation10 + $0x248] sm:$0xf]
    %v1468 = vld [vmem:[#allocation10 + $0x24c] sm:$0xff]
    %v1469 = vld [vmem:[#allocation10 + $0x254] sm:$0xf]
    %v1470 = vld [vmem:[#allocation10 + $0x258] sm:$0xff]
    %v1471 = vld [vmem:[#allocation10 + $0x260] sm:$0xf]
    %v1472 = vld [vmem:[#allocation10 + $0x264] sm:$0xff]
    %v1473 = vld [vmem:[#allocation10 + $0x26c] sm:$0xf]
    %v1474 = vld [vmem:[#allocation10 + $0x270] sm:$0xff]
    %v1475 = vld [vmem:[#allocation10 + $0x278] sm:$0xf]
    %v1476 = vld [vmem:[#allocation10 + $0x27c] sm:$0xff]
    %v1477 = vld [vmem:[#allocation10 + $0x284] sm:$0xf]
    %v1478 = vld [vmem:[#allocation10 + $0x288] sm:$0xff]
    %v1479 = vld [vmem:[#allocation10 + $0x290] sm:$0xf]
    %v1480 = vld [vmem:[#allocation10 + $0x294] sm:$0xff]
    %v1481 = vld [vmem:[#allocation10 + $0x29c] sm:$0xf]
    %v1482 = vld [vmem:[#allocation10 + $0x2a0] sm:$0xff]
    %v1483 = vld [vmem:[#allocation10 + $0x2a8] sm:$0xf]
    %v1484 = vld [vmem:[#allocation10 + $0x2ac] sm:$0xff]
    %v1485 = vld [vmem:[#allocation10 + $0x2b4] sm:$0xf]
    %v1486 = vld [vmem:[#allocation10 + $0x2b8] sm:$0xff]
    %v1487 = vld [vmem:[#allocation10 + $0x2c0] sm:$0xf]
    %v1488 = vld [vmem:[#allocation10 + $0x2c4] sm:$0xff]
    %v1489 = vld [vmem:[#allocation10 + $0x2cc] sm:$0xf]
    %v1490 = vld [vmem:[#allocation10 + $0x2d0] sm:$0xff]
    %v1491 = vld [vmem:[#allocation10 + $0x2d8] sm:$0xf]
    %v1492 = vld [vmem:[#allocation10 + $0x2dc] sm:$0xff]
    %v1493 = vld [vmem:[#allocation10 + $0x2e4] sm:$0xf]
    %v1494 = vld [vmem:[#allocation10 + $0x2e8] sm:$0xff]
    %v1495 = vld [vmem:[#allocation10 + $0x2f0] sm:$0xf]
    %v1496 = vld [vmem:[#allocation10 + $0x2f4] sm:$0xff]
    %v1497 = vld [vmem:[#allocation10 + $0x2fc] sm:$0xf]
    %v1498 = vld [vmem:[%s6] sm:$0x7]
    %v1500 = vlaneseq
    %v1501 = vshrl.u32 %v1500, 7
    %v1502 = vsub.s32 0, %v1501
    %v1503 = vrot.slane %v1498, %v1502
    %v1504 = vlaneseq
    %v1505 = vshrl.u32 %v1504, 7
    %v1506 = vsub.s32 1, %v1505
    %v1507 = vrot.slane %v1498, %v1506
    %v1508 = vlaneseq
    %v1509 = vshrl.u32 %v1508, 7
    %v1510 = vsub.s32 2, %v1509
    %v1511 = vrot.slane %v1498, %v1510
    %v1643 = vunpack.c.l.b16 %v1370
    %v1644 = vunpack.c.h.b16 %v1370
    %v1645 = vunpack.c.l.b16 %v1371
    %v1646 = vunpack.c.l.b16 %v1372
    %v1647 = vunpack.c.h.b16 %v1372
    %v1648 = vunpack.c.l.b16 %v1373
    %v1649 = vunpack.c.l.b16 %v1374
    %v1650 = vunpack.c.h.b16 %v1374
    %v1651 = vunpack.c.l.b16 %v1375
    %v1652 = vunpack.c.l.b16 %v1376
    %v1653 = vunpack.c.h.b16 %v1376
    %v1654 = vunpack.c.l.b16 %v1377
    %v1655 = vunpack.c.l.b16 %v1378
    %v1656 = vunpack.c.h.b16 %v1378
    %v1657 = vunpack.c.l.b16 %v1379
    %v1658 = vunpack.c.l.b16 %v1380
    %v1659 = vunpack.c.h.b16 %v1380
    %v1660 = vunpack.c.l.b16 %v1381
    %v1661 = vunpack.c.l.b16 %v1382
    %v1662 = vunpack.c.h.b16 %v1382
    %v1663 = vunpack.c.l.b16 %v1383
    %v1664 = vunpack.c.l.b16 %v1384
    %v1665 = vunpack.c.h.b16 %v1384
    %v1666 = vunpack.c.l.b16 %v1385
    %v1667 = vunpack.c.l.b16 %v1386
    %v1668 = vunpack.c.h.b16 %v1386
    %v1669 = vunpack.c.l.b16 %v1387
    %v1670 = vunpack.c.l.b16 %v1388
    %v1671 = vunpack.c.h.b16 %v1388
    %v1672 = vunpack.c.l.b16 %v1389
    %v1673 = vunpack.c.l.b16 %v1390
    %v1674 = vunpack.c.h.b16 %v1390
    %v1675 = vunpack.c.l.b16 %v1391
    %v1676 = vunpack.c.l.b16 %v1392
    %v1677 = vunpack.c.h.b16 %v1392
    %v1678 = vunpack.c.l.b16 %v1393
    %v1679 = vunpack.c.l.b16 %v1394
    %v1680 = vunpack.c.h.b16 %v1394
    %v1681 = vunpack.c.l.b16 %v1395
    %v1682 = vunpack.c.l.b16 %v1396
    %v1683 = vunpack.c.h.b16 %v1396
    %v1684 = vunpack.c.l.b16 %v1397
    %v1685 = vunpack.c.l.b16 %v1398
    %v1686 = vunpack.c.h.b16 %v1398
    %v1687 = vunpack.c.l.b16 %v1399
    %v1688 = vunpack.c.l.b16 %v1400
    %v1689 = vunpack.c.h.b16 %v1400
    %v1690 = vunpack.c.l.b16 %v1401
    %v1691 = vunpack.c.l.b16 %v1402
    %v1692 = vunpack.c.h.b16 %v1402
    %v1693 = vunpack.c.l.b16 %v1403
    %v1694 = vunpack.c.l.b16 %v1404
    %v1695 = vunpack.c.h.b16 %v1404
    %v1696 = vunpack.c.l.b16 %v1405
    %v1697 = vunpack.c.l.b16 %v1406
    %v1698 = vunpack.c.h.b16 %v1406
    %v1699 = vunpack.c.l.b16 %v1407
    %v1700 = vunpack.c.l.b16 %v1408
    %v1701 = vunpack.c.h.b16 %v1408
    %v1702 = vunpack.c.l.b16 %v1409
    %v1703 = vunpack.c.l.b16 %v1410
    %v1704 = vunpack.c.h.b16 %v1410
    %v1705 = vunpack.c.l.b16 %v1411
    %v1706 = vunpack.c.l.b16 %v1412
    %v1707 = vunpack.c.h.b16 %v1412
    %v1708 = vunpack.c.l.b16 %v1413
    %v1709 = vunpack.c.l.b16 %v1414
    %v1710 = vunpack.c.h.b16 %v1414
    %v1711 = vunpack.c.l.b16 %v1415
    %v1712 = vunpack.c.l.b16 %v1416
    %v1713 = vunpack.c.h.b16 %v1416
    %v1714 = vunpack.c.l.b16 %v1417
    %v1715 = vunpack.c.l.b16 %v1418
    %v1716 = vunpack.c.h.b16 %v1418
    %v1717 = vunpack.c.l.b16 %v1419
    %v1718 = vunpack.c.l.b16 %v1420
    %v1719 = vunpack.c.h.b16 %v1420
    %v1720 = vunpack.c.l.b16 %v1421
    %v1721 = vunpack.c.l.b16 %v1422
    %v1722 = vunpack.c.h.b16 %v1422
    %v1723 = vunpack.c.l.b16 %v1423
    %v1724 = vunpack.c.l.b16 %v1424
    %v1725 = vunpack.c.h.b16 %v1424
    %v1726 = vunpack.c.l.b16 %v1425
    %v1727 = vunpack.c.l.b16 %v1426
    %v1728 = vunpack.c.h.b16 %v1426
    %v1729 = vunpack.c.l.b16 %v1427
    %v1730 = vunpack.c.l.b16 %v1428
    %v1731 = vunpack.c.h.b16 %v1428
    %v1732 = vunpack.c.l.b16 %v1429
    %v1733 = vunpack.c.l.b16 %v1430
    %v1734 = vunpack.c.h.b16 %v1430
    %v1735 = vunpack.c.l.b16 %v1431
    %v1736 = vunpack.c.l.b16 %v1432
    %v1737 = vunpack.c.h.b16 %v1432
    %v1738 = vunpack.c.l.b16 %v1433
    %v1739 = vunpack.c.l.b16 %v1434
    %v1740 = vunpack.c.h.b16 %v1434
    %v1741 = vunpack.c.l.b16 %v1435
    %v1742 = vunpack.c.l.b16 %v1436
    %v1743 = vunpack.c.h.b16 %v1436
    %v1744 = vunpack.c.l.b16 %v1437
    %v1745 = vunpack.c.l.b16 %v1438
    %v1746 = vunpack.c.h.b16 %v1438
    %v1747 = vunpack.c.l.b16 %v1439
    %v1748 = vunpack.c.l.b16 %v1440
    %v1749 = vunpack.c.h.b16 %v1440
    %v1750 = vunpack.c.l.b16 %v1441
    %v1751 = vunpack.c.l.b16 %v1442
    %v1752 = vunpack.c.h.b16 %v1442
    %v1753 = vunpack.c.l.b16 %v1443
    %v1754 = vunpack.c.l.b16 %v1444
    %v1755 = vunpack.c.h.b16 %v1444
    %v1756 = vunpack.c.l.b16 %v1445
    %v1757 = vunpack.c.l.b16 %v1446
    %v1758 = vunpack.c.h.b16 %v1446
    %v1759 = vunpack.c.l.b16 %v1447
    %v1760 = vunpack.c.l.b16 %v1448
    %v1761 = vunpack.c.h.b16 %v1448
    %v1762 = vunpack.c.l.b16 %v1449
    %v1763 = vunpack.c.l.b16 %v1450
    %v1764 = vunpack.c.h.b16 %v1450
    %v1765 = vunpack.c.l.b16 %v1451
    %v1766 = vunpack.c.l.b16 %v1452
    %v1767 = vunpack.c.h.b16 %v1452
    %v1768 = vunpack.c.l.b16 %v1453
    %v1769 = vunpack.c.l.b16 %v1454
    %v1770 = vunpack.c.h.b16 %v1454
    %v1771 = vunpack.c.l.b16 %v1455
    %v1772 = vunpack.c.l.b16 %v1456
    %v1773 = vunpack.c.h.b16 %v1456
    %v1774 = vunpack.c.l.b16 %v1457
    %v1775 = vunpack.c.l.b16 %v1458
    %v1776 = vunpack.c.h.b16 %v1458
    %v1777 = vunpack.c.l.b16 %v1459
    %v1778 = vunpack.c.l.b16 %v1460
    %v1779 = vunpack.c.h.b16 %v1460
    %v1780 = vunpack.c.l.b16 %v1461
    %v1781 = vunpack.c.l.b16 %v1462
    %v1782 = vunpack.c.h.b16 %v1462
    %v1783 = vunpack.c.l.b16 %v1463
    %v1784 = vunpack.c.l.b16 %v1464
    %v1785 = vunpack.c.h.b16 %v1464
    %v1786 = vunpack.c.l.b16 %v1465
    %v1787 = vunpack.c.l.b16 %v1466
    %v1788 = vunpack.c.h.b16 %v1466
    %v1789 = vunpack.c.l.b16 %v1467
    %v1790 = vunpack.c.l.b16 %v1468
    %v1791 = vunpack.c.h.b16 %v1468
    %v1792 = vunpack.c.l.b16 %v1469
    %v1793 = vunpack.c.l.b16 %v1470
    %v1794 = vunpack.c.h.b16 %v1470
    %v1795 = vunpack.c.l.b16 %v1471
    %v1796 = vunpack.c.l.b16 %v1472
    %v1797 = vunpack.c.h.b16 %v1472
    %v1798 = vunpack.c.l.b16 %v1473
    %v1799 = vunpack.c.l.b16 %v1474
    %v1800 = vunpack.c.h.b16 %v1474
    %v1801 = vunpack.c.l.b16 %v1475
    %v1802 = vunpack.c.l.b16 %v1476
    %v1803 = vunpack.c.h.b16 %v1476
    %v1804 = vunpack.c.l.b16 %v1477
    %v1805 = vunpack.c.l.b16 %v1478
    %v1806 = vunpack.c.h.b16 %v1478
    %v1807 = vunpack.c.l.b16 %v1479
    %v1808 = vunpack.c.l.b16 %v1480
    %v1809 = vunpack.c.h.b16 %v1480
    %v1810 = vunpack.c.l.b16 %v1481
    %v1811 = vunpack.c.l.b16 %v1482
    %v1812 = vunpack.c.h.b16 %v1482
    %v1813 = vunpack.c.l.b16 %v1483
    %v1814 = vunpack.c.l.b16 %v1484
    %v1815 = vunpack.c.h.b16 %v1484
    %v1816 = vunpack.c.l.b16 %v1485
    %v1817 = vunpack.c.l.b16 %v1486
    %v1818 = vunpack.c.h.b16 %v1486
    %v1819 = vunpack.c.l.b16 %v1487
    %v1820 = vunpack.c.l.b16 %v1488
    %v1821 = vunpack.c.h.b16 %v1488
    %v1822 = vunpack.c.l.b16 %v1489
    %v1823 = vunpack.c.l.b16 %v1490
    %v1824 = vunpack.c.h.b16 %v1490
    %v1825 = vunpack.c.l.b16 %v1491
    %v1826 = vunpack.c.l.b16 %v1492
    %v1827 = vunpack.c.h.b16 %v1492
    %v1828 = vunpack.c.l.b16 %v1493
    %v1829 = vunpack.c.l.b16 %v1494
    %v1830 = vunpack.c.h.b16 %v1494
    %v1831 = vunpack.c.l.b16 %v1495
    %v1832 = vunpack.c.l.b16 %v1496
    %v1833 = vunpack.c.h.b16 %v1496
    %v1834 = vunpack.c.l.b16 %v1497
    %v1835 = vpack.c.b16 %v1646, %v1643
    %v1836 = vpack.c.b16 %v1647, %v1644
    %v1837 = vpack.c.b16 %v1648, %v1645
    %v1838 = vpack.c.b16 %v1652, %v1649
    %v1839 = vpack.c.b16 %v1653, %v1650
    %v1840 = vpack.c.b16 %v1654, %v1651
    %v1841 = vpack.c.b16 %v1658, %v1655
    %v1842 = vpack.c.b16 %v1659, %v1656
    %v1843 = vpack.c.b16 %v1660, %v1657
    %v1844 = vpack.c.b16 %v1664, %v1661
    %v1845 = vpack.c.b16 %v1665, %v1662
    %v1846 = vpack.c.b16 %v1666, %v1663
    %v1847 = vpack.c.b16 %v1670, %v1667
    %v1848 = vpack.c.b16 %v1671, %v1668
    %v1849 = vpack.c.b16 %v1672, %v1669
    %v1850 = vpack.c.b16 %v1676, %v1673
    %v1851 = vpack.c.b16 %v1677, %v1674
    %v1852 = vpack.c.b16 %v1678, %v1675
    %v1853 = vpack.c.b16 %v1682, %v1679
    %v1854 = vpack.c.b16 %v1683, %v1680
    %v1855 = vpack.c.b16 %v1684, %v1681
    %v1856 = vpack.c.b16 %v1688, %v1685
    %v1857 = vpack.c.b16 %v1689, %v1686
    %v1858 = vpack.c.b16 %v1690, %v1687
    %v1859 = vpack.c.b16 %v1694, %v1691
    %v1860 = vpack.c.b16 %v1695, %v1692
    %v1861 = vpack.c.b16 %v1696, %v1693
    %v1862 = vpack.c.b16 %v1700, %v1697
    %v1863 = vpack.c.b16 %v1701, %v1698
    %v1864 = vpack.c.b16 %v1702, %v1699
    %v1865 = vpack.c.b16 %v1706, %v1703
    %v1866 = vpack.c.b16 %v1707, %v1704
    %v1867 = vpack.c.b16 %v1708, %v1705
    %v1868 = vpack.c.b16 %v1712, %v1709
    %v1869 = vpack.c.b16 %v1713, %v1710
    %v1870 = vpack.c.b16 %v1714, %v1711
    %v1871 = vpack.c.b16 %v1718, %v1715
    %v1872 = vpack.c.b16 %v1719, %v1716
    %v1873 = vpack.c.b16 %v1720, %v1717
    %v1874 = vpack.c.b16 %v1724, %v1721
    %v1875 = vpack.c.b16 %v1725, %v1722
    %v1876 = vpack.c.b16 %v1726, %v1723
    %v1877 = vpack.c.b16 %v1730, %v1727
    %v1878 = vpack.c.b16 %v1731, %v1728
    %v1879 = vpack.c.b16 %v1732, %v1729
    %v1880 = vpack.c.b16 %v1736, %v1733
    %v1881 = vpack.c.b16 %v1737, %v1734
    %v1882 = vpack.c.b16 %v1738, %v1735
    %v1883 = vpack.c.b16 %v1742, %v1739
    %v1884 = vpack.c.b16 %v1743, %v1740
    %v1885 = vpack.c.b16 %v1744, %v1741
    %v1886 = vpack.c.b16 %v1748, %v1745
    %v1887 = vpack.c.b16 %v1749, %v1746
    %v1888 = vpack.c.b16 %v1750, %v1747
    %v1889 = vpack.c.b16 %v1754, %v1751
    %v1890 = vpack.c.b16 %v1755, %v1752
    %v1891 = vpack.c.b16 %v1756, %v1753
    %v1892 = vpack.c.b16 %v1760, %v1757
    %v1893 = vpack.c.b16 %v1761, %v1758
    %v1894 = vpack.c.b16 %v1762, %v1759
    %v1895 = vpack.c.b16 %v1766, %v1763
    %v1896 = vpack.c.b16 %v1767, %v1764
    %v1897 = vpack.c.b16 %v1768, %v1765
    %v1898 = vpack.c.b16 %v1772, %v1769
    %v1899 = vpack.c.b16 %v1773, %v1770
    %v1900 = vpack.c.b16 %v1774, %v1771
    %v1901 = vpack.c.b16 %v1778, %v1775
    %v1902 = vpack.c.b16 %v1779, %v1776
    %v1903 = vpack.c.b16 %v1780, %v1777
    %v1904 = vpack.c.b16 %v1784, %v1781
    %v1905 = vpack.c.b16 %v1785, %v1782
    %v1906 = vpack.c.b16 %v1786, %v1783
    %v1907 = vpack.c.b16 %v1790, %v1787
    %v1908 = vpack.c.b16 %v1791, %v1788
    %v1909 = vpack.c.b16 %v1792, %v1789
    %v1910 = vpack.c.b16 %v1796, %v1793
    %v1911 = vpack.c.b16 %v1797, %v1794
    %v1912 = vpack.c.b16 %v1798, %v1795
    %v1913 = vpack.c.b16 %v1802, %v1799
    %v1914 = vpack.c.b16 %v1803, %v1800
    %v1915 = vpack.c.b16 %v1804, %v1801
    %v1916 = vpack.c.b16 %v1808, %v1805
    %v1917 = vpack.c.b16 %v1809, %v1806
    %v1918 = vpack.c.b16 %v1810, %v1807
    %v1919 = vpack.c.b16 %v1814, %v1811
    %v1920 = vpack.c.b16 %v1815, %v1812
    %v1921 = vpack.c.b16 %v1816, %v1813
    %v1922 = vpack.c.b16 %v1820, %v1817
    %v1923 = vpack.c.b16 %v1821, %v1818
    %v1924 = vpack.c.b16 %v1822, %v1819
    %v1925 = vpack.c.b16 %v1826, %v1823
    %v1926 = vpack.c.b16 %v1827, %v1824
    %v1927 = vpack.c.b16 %v1828, %v1825
    %v1928 = vpack.c.b16 %v1832, %v1829
    %v1929 = vpack.c.b16 %v1833, %v1830
    %v1930 = vpack.c.b16 %v1834, %v1831
    %2027 = vmatprep.subr.bf16.mxu0 %v1836
    %2028 = vmatpush1.bf16.msra.mxu0 %v1835
    %2029 = vmatprep.subr.bf16.mxu0 %v1839
    %2030 = vmatpush1.bf16.msra.mxu0 %v1838
    %2031 = vmatprep.subr.bf16.mxu0 %v1842
    %2032 = vmatpush1.bf16.msra.mxu0 %v1841
    %2033 = vmatprep.subr.bf16.mxu0 %v1845
    %2034 = vmatpush1.bf16.msra.mxu0 %v1844
    %2035 = vmatprep.subr.bf16.mxu0 %v1848
    %2036 = vmatpush1.bf16.msra.mxu0 %v1847
    %2037 = vmatprep.subr.bf16.mxu0 %v1851
    %2038 = vmatpush1.bf16.msra.mxu0 %v1850
    %2039 = vmatprep.subr.bf16.mxu0 %v1854
    %2040 = vmatpush1.bf16.msra.mxu0 %v1853
    %2041 = vmatprep.subr.bf16.mxu0 %v1857
    %2042 = vmatpush1.bf16.msra.mxu0 %v1856
    %2043 = vmatprep.subr.bf16.mxu0 %v1860
    %2044 = vmatpush1.bf16.msra.mxu0 %v1859
    %2045 = vmatprep.subr.bf16.mxu0 %v1863
    %2046 = vmatpush1.bf16.msra.mxu0 %v1862
    %2047 = vmatprep.subr.bf16.mxu0 %v1866
    %2048 = vmatpush1.bf16.msra.mxu0 %v1865
    %2049 = vmatprep.subr.bf16.mxu0 %v1869
    %2050 = vmatpush1.bf16.msra.mxu0 %v1868
    %2051 = vmatprep.subr.bf16.mxu0 %v1872
    %2052 = vmatpush1.bf16.msra.mxu0 %v1871
    %2053 = vmatprep.subr.bf16.mxu0 %v1875
    %2054 = vmatpush1.bf16.msra.mxu0 %v1874
    %2055 = vmatprep.subr.bf16.mxu0 %v1878
    %2056 = vmatpush1.bf16.msra.mxu0 %v1877
    %2057 = vmatprep.subr.bf16.mxu0 %v1881
    %2058 = vmatpush1.bf16.msra.mxu0 %v1880
    %2059 = vmatprep.mubr.bf16.mxu0 %v545
    %2060 = vmatmul.mubr.bf16.gmra.mrb[0].mxu0 %v544
    %v2061 = vpop.f32.mrb[0].mxu0
    %v2062 = vadd.f32 %v1503, %v2061
    %v2063 = vpop.f32.mrb[0].mxu0
    %v2064 = vadd.f32 %v1507, %v2063
    %v2065 = vpop.f32.mrb[0].mxu0
    %v2066 = vpop.f32.mrb[0].mxu0
    %2067 = vdwg.mxu0
    %2068 = vmatprep.subr.bf16.mxu0 %v1884
    %2069 = vmatpush1.bf16.msra.mxu0 %v1883
    %2070 = vmatprep.subr.bf16.mxu0 %v1887
    %2071 = vmatpush1.bf16.msra.mxu0 %v1886
    %2072 = vmatprep.subr.bf16.mxu0 %v1890
    %2073 = vmatpush1.bf16.msra.mxu0 %v1889
    %2074 = vmatprep.subr.bf16.mxu0 %v1893
    %2075 = vmatpush1.bf16.msra.mxu0 %v1892
    %2076 = vmatprep.subr.bf16.mxu0 %v1896
    %2077 = vmatpush1.bf16.msra.mxu0 %v1895
    %2078 = vmatprep.subr.bf16.mxu0 %v1899
    %2079 = vmatpush1.bf16.msra.mxu0 %v1898
    %2080 = vmatprep.subr.bf16.mxu0 %v1902
    %2081 = vmatpush1.bf16.msra.mxu0 %v1901
    %2082 = vmatprep.subr.bf16.mxu0 %v1905
    %2083 = vmatpush1.bf16.msra.mxu0 %v1904
    %2084 = vmatprep.subr.bf16.mxu0 %v1908
    %2085 = vmatpush1.bf16.msra.mxu0 %v1907
    %2086 = vmatprep.subr.bf16.mxu0 %v1911
    %2087 = vmatpush1.bf16.msra.mxu0 %v1910
    %2088 = vmatprep.subr.bf16.mxu0 %v1914
    %2089 = vmatpush1.bf16.msra.mxu0 %v1913
    %2090 = vmatprep.subr.bf16.mxu0 %v1917
    %2091 = vmatpush1.bf16.msra.mxu0 %v1916
    %2092 = vmatprep.subr.bf16.mxu0 %v1920
    %2093 = vmatpush1.bf16.msra.mxu0 %v1919
    %2094 = vmatprep.subr.bf16.mxu0 %v1923
    %2095 = vmatpush1.bf16.msra.mxu0 %v1922
    %2096 = vmatprep.subr.bf16.mxu0 %v1926
    %2097 = vmatpush1.bf16.msra.mxu0 %v1925
    %2098 = vmatprep.subr.bf16.mxu0 %v1929
    %2099 = vmatpush1.bf16.msra.mxu0 %v1928
    %2100 = vmatprep.mubr.bf16.mxu0 %v547
    %2101 = vmatmul.mubr.bf16.gmra.mrb[0].mxu0 %v546
    %v2102 = vpop.f32.mrb[0].mxu0
    %v2103 = vadd.f32 %v2062, %v2102
    %v2104 = vpop.f32.mrb[0].mxu0
    %v2105 = vadd.f32 %v2064, %v2104
    %v2106 = vpop.f32.mrb[0].mxu0
    %v2107 = vpop.f32.mrb[0].mxu0
    %2108 = vdwg.mxu0
    %2109 = vmatprep.subr.bf16.mxu0 0
    %2110 = vmatpush1.bf16.msra.mxu0 %v1837
    %2111 = vmatprep.subr.bf16.mxu0 0
    %2112 = vmatpush1.bf16.msra.mxu0 %v1840
    %2113 = vmatprep.subr.bf16.mxu0 0
    %2114 = vmatpush1.bf16.msra.mxu0 %v1843
    %2115 = vmatprep.subr.bf16.mxu0 0
    %2116 = vmatpush1.bf16.msra.mxu0 %v1846
    %2117 = vmatprep.subr.bf16.mxu0 0
    %2118 = vmatpush1.bf16.msra.mxu0 %v1849
    %2119 = vmatprep.subr.bf16.mxu0 0
    %2120 = vmatpush1.bf16.msra.mxu0 %v1852
    %2121 = vmatprep.subr.bf16.mxu0 0
    %2122 = vmatpush1.bf16.msra.mxu0 %v1855
    %2123 = vmatprep.subr.bf16.mxu0 0
    %2124 = vmatpush1.bf16.msra.mxu0 %v1858
    %2125 = vmatprep.subr.bf16.mxu0 0
    %2126 = vmatpush1.bf16.msra.mxu0 %v1861
    %2127 = vmatprep.subr.bf16.mxu0 0
    %2128 = vmatpush1.bf16.msra.mxu0 %v1864
    %2129 = vmatprep.subr.bf16.mxu0 0
    %2130 = vmatpush1.bf16.msra.mxu0 %v1867
    %2131 = vmatprep.subr.bf16.mxu0 0
    %2132 = vmatpush1.bf16.msra.mxu0 %v1870
    %2133 = vmatprep.subr.bf16.mxu0 0
    %2134 = vmatpush1.bf16.msra.mxu0 %v1873
    %2135 = vmatprep.subr.bf16.mxu0 0
    %2136 = vmatpush1.bf16.msra.mxu0 %v1876
    %2137 = vmatprep.subr.bf16.mxu0 0
    %2138 = vmatpush1.bf16.msra.mxu0 %v1879
    %2139 = vmatprep.subr.bf16.mxu0 0
    %2140 = vmatpush1.bf16.msra.mxu0 %v1882
    %2141 = vmatprep.mubr.bf16.mxu0 %v545
    %2142 = vmatmul.mubr.bf16.gmra.mrb[0].mxu0 %v544
    %v2143 = vpop.f32.mrb[0].mxu0
    %v2144 = vadd.f32 %v1511, %v2143
    %v2145 = vpop.f32.mrb[0].mxu0
    %v2146 = vpop.f32.mrb[0].mxu0
    %v2147 = vpop.f32.mrb[0].mxu0
    %2148 = vdwg.mxu0
    %2149 = vmatprep.subr.bf16.mxu0 0
    %2150 = vmatpush1.bf16.msra.mxu0 %v1885
    %2151 = vmatprep.subr.bf16.mxu0 0
    %2152 = vmatpush1.bf16.msra.mxu0 %v1888
    %2153 = vmatprep.subr.bf16.mxu0 0
    %2154 = vmatpush1.bf16.msra.mxu0 %v1891
    %2155 = vmatprep.subr.bf16.mxu0 0
    %2156 = vmatpush1.bf16.msra.mxu0 %v1894
    %2157 = vmatprep.subr.bf16.mxu0 0
    %2158 = vmatpush1.bf16.msra.mxu0 %v1897
    %2159 = vmatprep.subr.bf16.mxu0 0
    %2160 = vmatpush1.bf16.msra.mxu0 %v1900
    %2161 = vmatprep.subr.bf16.mxu0 0
    %2162 = vmatpush1.bf16.msra.mxu0 %v1903
    %2163 = vmatprep.subr.bf16.mxu0 0
    %2164 = vmatpush1.bf16.msra.mxu0 %v1906
    %2165 = vmatprep.subr.bf16.mxu0 0
    %2166 = vmatpush1.bf16.msra.mxu0 %v1909
    %2167 = vmatprep.subr.bf16.mxu0 0
    %2168 = vmatpush1.bf16.msra.mxu0 %v1912
    %2169 = vmatprep.subr.bf16.mxu0 0
    %2170 = vmatpush1.bf16.msra.mxu0 %v1915
    %2171 = vmatprep.subr.bf16.mxu0 0
    %2172 = vmatpush1.bf16.msra.mxu0 %v1918
    %2173 = vmatprep.subr.bf16.mxu0 0
    %2174 = vmatpush1.bf16.msra.mxu0 %v1921
    %2175 = vmatprep.subr.bf16.mxu0 0
    %2176 = vmatpush1.bf16.msra.mxu0 %v1924
    %2177 = vmatprep.subr.bf16.mxu0 0
    %2178 = vmatpush1.bf16.msra.mxu0 %v1927
    %2179 = vmatprep.subr.bf16.mxu0 0
    %2180 = vmatpush1.bf16.msra.mxu0 %v1930
    %2181 = vmatprep.mubr.bf16.mxu0 %v547
    %2182 = vmatmul.mubr.bf16.gmra.mrb[0].mxu0 %v546
    %v2183 = vpop.f32.mrb[0].mxu0
    %v2184 = vadd.f32 %v2144, %v2183
    %v2185 = vpop.f32.mrb[0].mxu0
    %v2186 = vpop.f32.mrb[0].mxu0
    %v2187 = vpop.f32.mrb[0].mxu0
    %2188 = vdwg.mxu0
    %v2189 = vmax.f32 %v2103, 0.0
    %v2190 = vmax.f32 %v2105, 0.0
    %v2191 = vmax.f32 %v2184, 0.0
    %v2192 = vpack.c.bf16 %v1367, %v1367
    %v2193 = vpack.c.bf16 %v1368, %v1368
    %v2194 = vpack.c.bf16 %v1369, %v1369
    %v2195 = vld [vmem:[#allocation11] sm:$0xf]
    %v2196 = vld [vmem:[#allocation11 + $0x4] sm:$0xf]
    %v2197 = vld [vmem:[#allocation11 + $0x8] sm:$0xf]
    %v2198 = vld [vmem:[#allocation11 + $0xc] sm:$0xf]
    %v2199 = vld [vmem:[#allocation11 + $0x10] sm:$0xf]
    %v2200 = vld [vmem:[#allocation11 + $0x14] sm:$0xf]
    %v2201 = vld [vmem:[#allocation11 + $0x18] sm:$0xf]
    %v2202 = vld [vmem:[#allocation11 + $0x1c] sm:$0xf]
    %v2203 = vld [vmem:[#allocation11 + $0x20] sm:$0xf]
    %v2204 = vld [vmem:[#allocation11 + $0x24] sm:$0xf]
    %v2205 = vld [vmem:[#allocation11 + $0x28] sm:$0xf]
    %v2206 = vld [vmem:[#allocation11 + $0x2c] sm:$0xf]
    %v2207 = vld [vmem:[#allocation11 + $0x30] sm:$0xf]
    %v2208 = vld [vmem:[#allocation11 + $0x34] sm:$0xf]
    %v2209 = vld [vmem:[#allocation11 + $0x38] sm:$0xf]
    %v2210 = vld [vmem:[#allocation11 + $0x3c] sm:$0xf]
    %v2211 = vld [vmem:[#allocation11 + $0x40] sm:$0xf]
    %v2212 = vld [vmem:[#allocation11 + $0x44] sm:$0xf]
    %v2213 = vld [vmem:[#allocation11 + $0x48] sm:$0xf]
    %v2214 = vld [vmem:[#allocation11 + $0x4c] sm:$0xf]
    %v2215 = vld [vmem:[#allocation11 + $0x50] sm:$0xf]
    %v2216 = vld [vmem:[#allocation11 + $0x54] sm:$0xf]
    %v2217 = vld [vmem:[#allocation11 + $0x58] sm:$0xf]
    %v2218 = vld [vmem:[#allocation11 + $0x5c] sm:$0xf]
    %v2219 = vld [vmem:[#allocation11 + $0x60] sm:$0xf]
    %v2220 = vld [vmem:[#allocation11 + $0x64] sm:$0xf]
    %v2221 = vld [vmem:[#allocation11 + $0x68] sm:$0xf]
    %v2222 = vld [vmem:[#allocation11 + $0x6c] sm:$0xf]
    %v2223 = vld [vmem:[#allocation11 + $0x70] sm:$0xf]
    %v2224 = vld [vmem:[#allocation11 + $0x74] sm:$0xf]
    %v2225 = vld [vmem:[#allocation11 + $0x78] sm:$0xf]
    %v2226 = vld [vmem:[#allocation11 + $0x7c] sm:$0xf]
    %v2227 = vld [vmem:[#allocation11 + $0x80] sm:$0xf]
    %v2228 = vld [vmem:[#allocation11 + $0x84] sm:$0xf]
    %v2229 = vld [vmem:[#allocation11 + $0x88] sm:$0xf]
    %v2230 = vld [vmem:[#allocation11 + $0x8c] sm:$0xf]
    %v2231 = vld [vmem:[#allocation11 + $0x90] sm:$0xf]
    %v2232 = vld [vmem:[#allocation11 + $0x94] sm:$0xf]
    %v2233 = vld [vmem:[#allocation11 + $0x98] sm:$0xf]
    %v2234 = vld [vmem:[#allocation11 + $0x9c] sm:$0xf]
    %v2235 = vld [vmem:[#allocation11 + $0xa0] sm:$0xf]
    %v2236 = vld [vmem:[#allocation11 + $0xa4] sm:$0xf]
    %v2237 = vld [vmem:[#allocation11 + $0xa8] sm:$0xf]
    %v2238 = vld [vmem:[#allocation11 + $0xac] sm:$0xf]
    %v2239 = vld [vmem:[#allocation11 + $0xb0] sm:$0xf]
    %v2240 = vld [vmem:[#allocation11 + $0xb4] sm:$0xf]
    %v2241 = vld [vmem:[#allocation11 + $0xb8] sm:$0xf]
    %v2242 = vld [vmem:[#allocation11 + $0xbc] sm:$0xf]
    %v2243 = vpack.c.bf16 %v2189, %v2189
    %v2244 = vpack.c.bf16 %v2190, %v2190
    %v2245 = vpack.c.bf16 %v2191, %v2191
    %v2246 = vld [vmem:[#allocation13] sm:$0xf]
    %v2247 = vld [vmem:[#allocation13 + $0x4] sm:$0xf]
    %v2248 = vld [vmem:[#allocation13 + $0x8] sm:$0xf]
    %v2249 = vld [vmem:[#allocation13 + $0xc] sm:$0xf]
    %v2250 = vld [vmem:[#allocation13 + $0x10] sm:$0xf]
    %v2251 = vld [vmem:[#allocation13 + $0x14] sm:$0xf]
    %v2252 = vld [vmem:[#allocation13 + $0x18] sm:$0xf]
    %v2253 = vld [vmem:[#allocation13 + $0x1c] sm:$0xf]
    %v2254 = vld [vmem:[#allocation13 + $0x20] sm:$0xf]
    %v2255 = vld [vmem:[#allocation13 + $0x24] sm:$0xf]
    %v2256 = vld [vmem:[#allocation13 + $0x28] sm:$0xf]
    %v2257 = vld [vmem:[#allocation13 + $0x2c] sm:$0xf]
    %v2258 = vld [vmem:[#allocation13 + $0x30] sm:$0xf]
    %v2259 = vld [vmem:[#allocation13 + $0x34] sm:$0xf]
    %v2260 = vld [vmem:[#allocation13 + $0x38] sm:$0xf]
    %v2261 = vld [vmem:[#allocation13 + $0x3c] sm:$0xf]
    %v2262 = vld [vmem:[#allocation13 + $0x40] sm:$0xf]
    %v2263 = vld [vmem:[#allocation13 + $0x44] sm:$0xf]
    %v2264 = vld [vmem:[#allocation13 + $0x48] sm:$0xf]
    %v2265 = vld [vmem:[#allocation13 + $0x4c] sm:$0xf]
    %v2266 = vld [vmem:[#allocation13 + $0x50] sm:$0xf]
    %v2267 = vld [vmem:[#allocation13 + $0x54] sm:$0xf]
    %v2268 = vld [vmem:[#allocation13 + $0x58] sm:$0xf]
    %v2269 = vld [vmem:[#allocation13 + $0x5c] sm:$0xf]
    %v2270 = vld [vmem:[#allocation13 + $0x60] sm:$0xf]
    %v2271 = vld [vmem:[#allocation13 + $0x64] sm:$0xf]
    %v2272 = vld [vmem:[#allocation13 + $0x68] sm:$0xf]
    %v2273 = vld [vmem:[#allocation13 + $0x6c] sm:$0xf]
    %v2274 = vld [vmem:[#allocation13 + $0x70] sm:$0xf]
    %v2275 = vld [vmem:[#allocation13 + $0x74] sm:$0xf]
    %v2276 = vld [vmem:[#allocation13 + $0x78] sm:$0xf]
    %v2277 = vld [vmem:[#allocation13 + $0x7c] sm:$0xf]
    %v2278 = vld [vmem:[#allocation13 + $0x80] sm:$0xf]
    %v2279 = vld [vmem:[#allocation13 + $0x84] sm:$0xf]
    %v2280 = vld [vmem:[#allocation13 + $0x88] sm:$0xf]
    %v2281 = vld [vmem:[#allocation13 + $0x8c] sm:$0xf]
    %v2282 = vld [vmem:[#allocation13 + $0x90] sm:$0xf]
    %v2283 = vld [vmem:[#allocation13 + $0x94] sm:$0xf]
    %v2284 = vld [vmem:[#allocation13 + $0x98] sm:$0xf]
    %v2285 = vld [vmem:[#allocation13 + $0x9c] sm:$0xf]
    %v2286 = vld [vmem:[#allocation13 + $0xa0] sm:$0xf]
    %v2287 = vld [vmem:[#allocation13 + $0xa4] sm:$0xf]
    %v2288 = vld [vmem:[#allocation13 + $0xa8] sm:$0xf]
    %v2289 = vld [vmem:[#allocation13 + $0xac] sm:$0xf]
    %v2290 = vld [vmem:[#allocation13 + $0xb0] sm:$0xf]
    %v2291 = vld [vmem:[#allocation13 + $0xb4] sm:$0xf]
    %v2292 = vld [vmem:[#allocation13 + $0xb8] sm:$0xf]
    %v2293 = vld [vmem:[#allocation13 + $0xbc] sm:$0xf]
    %v2342 = vunpack.c.l.b16 %v2246
    %v2343 = vunpack.c.l.b16 %v2247
    %v2344 = vunpack.c.l.b16 %v2248
    %v2345 = vunpack.c.l.b16 %v2249
    %v2346 = vunpack.c.l.b16 %v2250
    %v2347 = vunpack.c.l.b16 %v2251
    %v2348 = vunpack.c.l.b16 %v2252
    %v2349 = vunpack.c.l.b16 %v2253
    %v2350 = vunpack.c.l.b16 %v2254
    %v2351 = vunpack.c.l.b16 %v2255
    %v2352 = vunpack.c.l.b16 %v2256
    %v2353 = vunpack.c.l.b16 %v2257
    %v2354 = vunpack.c.l.b16 %v2258
    %v2355 = vunpack.c.l.b16 %v2259
    %v2356 = vunpack.c.l.b16 %v2260
    %v2357 = vunpack.c.l.b16 %v2261
    %v2358 = vunpack.c.l.b16 %v2262
    %v2359 = vunpack.c.l.b16 %v2263
    %v2360 = vunpack.c.l.b16 %v2264
    %v2361 = vunpack.c.l.b16 %v2265
    %v2362 = vunpack.c.l.b16 %v2266
    %v2363 = vunpack.c.l.b16 %v2267
    %v2364 = vunpack.c.l.b16 %v2268
    %v2365 = vunpack.c.l.b16 %v2269
    %v2366 = vunpack.c.l.b16 %v2270
    %v2367 = vunpack.c.l.b16 %v2271
    %v2368 = vunpack.c.l.b16 %v2272
    %v2369 = vunpack.c.l.b16 %v2273
    %v2370 = vunpack.c.l.b16 %v2274
    %v2371 = vunpack.c.l.b16 %v2275
    %v2372 = vunpack.c.l.b16 %v2276
    %v2373 = vunpack.c.l.b16 %v2277
    %v2374 = vunpack.c.l.b16 %v2278
    %v2375 = vunpack.c.l.b16 %v2279
    %v2376 = vunpack.c.l.b16 %v2280
    %v2377 = vunpack.c.l.b16 %v2281
    %v2378 = vunpack.c.l.b16 %v2282
    %v2379 = vunpack.c.l.b16 %v2283
    %v2380 = vunpack.c.l.b16 %v2284
    %v2381 = vunpack.c.l.b16 %v2285
    %v2382 = vunpack.c.l.b16 %v2286
    %v2383 = vunpack.c.l.b16 %v2287
    %v2384 = vunpack.c.l.b16 %v2288
    %v2385 = vunpack.c.l.b16 %v2289
    %v2386 = vunpack.c.l.b16 %v2290
    %v2387 = vunpack.c.l.b16 %v2291
    %v2388 = vunpack.c.l.b16 %v2292
    %v2389 = vunpack.c.l.b16 %v2293
    %v2390 = vpack.c.b16 %v2343, %v2342
    %v2391 = vpack.c.b16 %v2345, %v2344
    %v2392 = vpack.c.b16 %v2347, %v2346
    %v2393 = vpack.c.b16 %v2349, %v2348
    %v2394 = vpack.c.b16 %v2351, %v2350
    %v2395 = vpack.c.b16 %v2353, %v2352
    %v2396 = vpack.c.b16 %v2355, %v2354
    %v2397 = vpack.c.b16 %v2357, %v2356
    %v2398 = vpack.c.b16 %v2359, %v2358
    %v2399 = vpack.c.b16 %v2361, %v2360
    %v2400 = vpack.c.b16 %v2363, %v2362
    %v2401 = vpack.c.b16 %v2365, %v2364
    %v2402 = vpack.c.b16 %v2367, %v2366
    %v2403 = vpack.c.b16 %v2369, %v2368
    %v2404 = vpack.c.b16 %v2371, %v2370
    %v2405 = vpack.c.b16 %v2373, %v2372
    %v2406 = vpack.c.b16 %v2375, %v2374
    %v2407 = vpack.c.b16 %v2377, %v2376
    %v2408 = vpack.c.b16 %v2379, %v2378
    %v2409 = vpack.c.b16 %v2381, %v2380
    %v2410 = vpack.c.b16 %v2383, %v2382
    %v2411 = vpack.c.b16 %v2385, %v2384
    %v2412 = vpack.c.b16 %v2387, %v2386
    %v2413 = vpack.c.b16 %v2389, %v2388
    %2438 = vmatprep.subr.bf16.mxu0 0
    %2439 = vmatpush1.bf16.msra.mxu0 %v2390
    %2440 = vmatprep.subr.bf16.mxu0 0
    %2441 = vmatpush1.bf16.msra.mxu0 %v2391
    %2442 = vmatprep.subr.bf16.mxu0 0
    %2443 = vmatpush1.bf16.msra.mxu0 %v2392
    %2444 = vmatprep.subr.bf16.mxu0 0
    %2445 = vmatpush1.bf16.msra.mxu0 %v2393
    %2446 = vmatprep.subr.bf16.mxu0 0
    %2447 = vmatpush1.bf16.msra.mxu0 %v2394
    %2448 = vmatprep.subr.bf16.mxu0 0
    %2449 = vmatpush1.bf16.msra.mxu0 %v2395
    %2450 = vmatprep.subr.bf16.mxu0 0
    %2451 = vmatpush1.bf16.msra.mxu0 %v2396
    %2452 = vmatprep.subr.bf16.mxu0 0
    %2453 = vmatpush1.bf16.msra.mxu0 %v2397
    %2454 = vmatprep.subr.bf16.mxu0 0
    %2455 = vmatpush1.bf16.msra.mxu0 %v2398
    %2456 = vmatprep.subr.bf16.mxu0 0
    %2457 = vmatpush1.bf16.msra.mxu0 %v2399
    %2458 = vmatprep.subr.bf16.mxu0 0
    %2459 = vmatpush1.bf16.msra.mxu0 %v2400
    %2460 = vmatprep.subr.bf16.mxu0 0
    %2461 = vmatpush1.bf16.msra.mxu0 %v2401
    %2462 = vmatprep.subr.bf16.mxu0 0
    %2463 = vmatpush1.bf16.msra.mxu0 %v2402
    %2464 = vmatprep.subr.bf16.mxu0 0
    %2465 = vmatpush1.bf16.msra.mxu0 %v2403
    %2466 = vmatprep.subr.bf16.mxu0 0
    %2467 = vmatpush1.bf16.msra.mxu0 %v2404
    %2468 = vmatprep.subr.bf16.mxu0 0
    %2469 = vmatpush1.bf16.msra.mxu0 %v2405
    %2470 = vmatprep.mubr.bf16.mxu0 %v2244
    %2471 = vmatmul.mubr.bf16.gmra.mrb[0].mxu0 %v2243
    %v2472 = vpop.f32.mrb[0].mxu0
    %v2473 = vadd.f32 0.0, %v2472
    %v2474 = vpop.f32.mrb[0].mxu0
    %v2475 = vpop.f32.mrb[0].mxu0
    %v2476 = vpop.f32.mrb[0].mxu0
    %2477 = vdwg.mxu0
    %2478 = vmatprep.subr.bf16.mxu0 0
    %2479 = vmatpush1.bf16.msra.mxu0 %v2406
    %2480 = vmatprep.subr.bf16.mxu0 0
    %2481 = vmatpush1.bf16.msra.mxu0 %v2407
    %2482 = vmatprep.subr.bf16.mxu0 0
    %2483 = vmatpush1.bf16.msra.mxu0 %v2408
    %2484 = vmatprep.subr.bf16.mxu0 0
    %2485 = vmatpush1.bf16.msra.mxu0 %v2409
    %2486 = vmatprep.subr.bf16.mxu0 0
    %2487 = vmatpush1.bf16.msra.mxu0 %v2410
    %2488 = vmatprep.subr.bf16.mxu0 0
    %2489 = vmatpush1.bf16.msra.mxu0 %v2411
    %2490 = vmatprep.subr.bf16.mxu0 0
    %2491 = vmatpush1.bf16.msra.mxu0 %v2412
    %2492 = vmatprep.subr.bf16.mxu0 0
    %2493 = vmatpush1.bf16.msra.mxu0 %v2413
    %2494 = vmatprep.subr.bf16.mxu0 0
    %2495 = vmatpush1.bf16.msra.mxu0 0
    %2496 = vmatprep.subr.bf16.mxu0 0
    %2497 = vmatpush1.bf16.msra.mxu0 0
    %2498 = vmatprep.subr.bf16.mxu0 0
    %2499 = vmatpush1.bf16.msra.mxu0 0
    %2500 = vmatprep.subr.bf16.mxu0 0
    %2501 = vmatpush1.bf16.msra.mxu0 0
    %2502 = vmatprep.subr.bf16.mxu0 0
    %2503 = vmatpush1.bf16.msra.mxu0 0
    %2504 = vmatprep.subr.bf16.mxu0 0
    %2505 = vmatpush1.bf16.msra.mxu0 0
    %2506 = vmatprep.subr.bf16.mxu0 0
    %2507 = vmatpush1.bf16.msra.mxu0 0
    %2508 = vmatprep.subr.bf16.mxu0 0
    %2509 = vmatpush1.bf16.msra.mxu0 0
    %2510 = vmatprep.mubr.bf16.mxu0 0
    %2511 = vmatmul.mubr.bf16.gmra.mrb[0].mxu0 %v2245
    %v2512 = vpop.f32.mrb[0].mxu0
    %v2513 = vadd.f32 %v2473, %v2512
    %v2514 = vpop.f32.mrb[0].mxu0
    %v2515 = vpop.f32.mrb[0].mxu0
    %v2516 = vpop.f32.mrb[0].mxu0
    %2517 = vdwg.mxu0
    %v2566 = vunpack.c.l.b16 %v2195
    %v2567 = vunpack.c.l.b16 %v2196
    %v2568 = vunpack.c.l.b16 %v2197
    %v2569 = vunpack.c.l.b16 %v2198
    %v2570 = vunpack.c.l.b16 %v2199
    %v2571 = vunpack.c.l.b16 %v2200
    %v2572 = vunpack.c.l.b16 %v2201
    %v2573 = vunpack.c.l.b16 %v2202
    %v2574 = vunpack.c.l.b16 %v2203
    %v2575 = vunpack.c.l.b16 %v2204
    %v2576 = vunpack.c.l.b16 %v2205
    %v2577 = vunpack.c.l.b16 %v2206
    %v2578 = vunpack.c.l.b16 %v2207
    %v2579 = vunpack.c.l.b16 %v2208
    %v2580 = vunpack.c.l.b16 %v2209
    %v2581 = vunpack.c.l.b16 %v2210
    %v2582 = vunpack.c.l.b16 %v2211
    %v2583 = vunpack.c.l.b16 %v2212
    %v2584 = vunpack.c.l.b16 %v2213
    %v2585 = vunpack.c.l.b16 %v2214
    %v2586 = vunpack.c.l.b16 %v2215
    %v2587 = vunpack.c.l.b16 %v2216
    %v2588 = vunpack.c.l.b16 %v2217
    %v2589 = vunpack.c.l.b16 %v2218
    %v2590 = vunpack.c.l.b16 %v2219
    %v2591 = vunpack.c.l.b16 %v2220
    %v2592 = vunpack.c.l.b16 %v2221
    %v2593 = vunpack.c.l.b16 %v2222
    %v2594 = vunpack.c.l.b16 %v2223
    %v2595 = vunpack.c.l.b16 %v2224
    %v2596 = vunpack.c.l.b16 %v2225
    %v2597 = vunpack.c.l.b16 %v2226
    %v2598 = vunpack.c.l.b16 %v2227
    %v2599 = vunpack.c.l.b16 %v2228
    %v2600 = vunpack.c.l.b16 %v2229
    %v2601 = vunpack.c.l.b16 %v2230
    %v2602 = vunpack.c.l.b16 %v2231
    %v2603 = vunpack.c.l.b16 %v2232
    %v2604 = vunpack.c.l.b16 %v2233
    %v2605 = vunpack.c.l.b16 %v2234
    %v2606 = vunpack.c.l.b16 %v2235
    %v2607 = vunpack.c.l.b16 %v2236
    %v2608 = vunpack.c.l.b16 %v2237
    %v2609 = vunpack.c.l.b16 %v2238
    %v2610 = vunpack.c.l.b16 %v2239
    %v2611 = vunpack.c.l.b16 %v2240
    %v2612 = vunpack.c.l.b16 %v2241
    %v2613 = vunpack.c.l.b16 %v2242
    %v2614 = vpack.c.b16 %v2567, %v2566
    %v2615 = vpack.c.b16 %v2569, %v2568
    %v2616 = vpack.c.b16 %v2571, %v2570
    %v2617 = vpack.c.b16 %v2573, %v2572
    %v2618 = vpack.c.b16 %v2575, %v2574
    %v2619 = vpack.c.b16 %v2577, %v2576
    %v2620 = vpack.c.b16 %v2579, %v2578
    %v2621 = vpack.c.b16 %v2581, %v2580
    %v2622 = vpack.c.b16 %v2583, %v2582
    %v2623 = vpack.c.b16 %v2585, %v2584
    %v2624 = vpack.c.b16 %v2587, %v2586
    %v2625 = vpack.c.b16 %v2589, %v2588
    %v2626 = vpack.c.b16 %v2591, %v2590
    %v2627 = vpack.c.b16 %v2593, %v2592
    %v2628 = vpack.c.b16 %v2595, %v2594
    %v2629 = vpack.c.b16 %v2597, %v2596
    %v2630 = vpack.c.b16 %v2599, %v2598
    %v2631 = vpack.c.b16 %v2601, %v2600
    %v2632 = vpack.c.b16 %v2603, %v2602
    %v2633 = vpack.c.b16 %v2605, %v2604
    %v2634 = vpack.c.b16 %v2607, %v2606
    %v2635 = vpack.c.b16 %v2609, %v2608
    %v2636 = vpack.c.b16 %v2611, %v2610
    %v2637 = vpack.c.b16 %v2613, %v2612
    %2662 = vmatprep.subr.bf16.mxu0 0
    %2663 = vmatpush1.bf16.msra.mxu0 %v2614
    %2664 = vmatprep.subr.bf16.mxu0 0
    %2665 = vmatpush1.bf16.msra.mxu0 %v2615
    %2666 = vmatprep.subr.bf16.mxu0 0
    %2667 = vmatpush1.bf16.msra.mxu0 %v2616
    %2668 = vmatprep.subr.bf16.mxu0 0
    %2669 = vmatpush1.bf16.msra.mxu0 %v2617
    %2670 = vmatprep.subr.bf16.mxu0 0
    %2671 = vmatpush1.bf16.msra.mxu0 %v2618
    %2672 = vmatprep.subr.bf16.mxu0 0
    %2673 = vmatpush1.bf16.msra.mxu0 %v2619
    %2674 = vmatprep.subr.bf16.mxu0 0
    %2675 = vmatpush1.bf16.msra.mxu0 %v2620
    %2676 = vmatprep.subr.bf16.mxu0 0
    %2677 = vmatpush1.bf16.msra.mxu0 %v2621
    %2678 = vmatprep.subr.bf16.mxu0 0
    %2679 = vmatpush1.bf16.msra.mxu0 %v2622
    %2680 = vmatprep.subr.bf16.mxu0 0
    %2681 = vmatpush1.bf16.msra.mxu0 %v2623
    %2682 = vmatprep.subr.bf16.mxu0 0
    %2683 = vmatpush1.bf16.msra.mxu0 %v2624
    %2684 = vmatprep.subr.bf16.mxu0 0
    %2685 = vmatpush1.bf16.msra.mxu0 %v2625
    %2686 = vmatprep.subr.bf16.mxu0 0
    %2687 = vmatpush1.bf16.msra.mxu0 %v2626
    %2688 = vmatprep.subr.bf16.mxu0 0
    %2689 = vmatpush1.bf16.msra.mxu0 %v2627
    %2690 = vmatprep.subr.bf16.mxu0 0
    %2691 = vmatpush1.bf16.msra.mxu0 %v2628
    %2692 = vmatprep.subr.bf16.mxu0 0
    %2693 = vmatpush1.bf16.msra.mxu0 %v2629
    %2694 = vmatprep.mubr.bf16.mxu0 %v2193
    %2695 = vmatmul.mubr.bf16.gmra.mrb[0].mxu0 %v2192
    %v2696 = vpop.f32.mrb[0].mxu0
    %v2697 = vadd.f32 %v2513, %v2696
    %v2698 = vpop.f32.mrb[0].mxu0
    %v2699 = vpop.f32.mrb[0].mxu0
    %v2700 = vpop.f32.mrb[0].mxu0
    %2701 = vdwg.mxu0
    %2702 = vmatprep.subr.bf16.mxu0 0
    %2703 = vmatpush1.bf16.msra.mxu0 %v2630
    %2704 = vmatprep.subr.bf16.mxu0 0
    %2705 = vmatpush1.bf16.msra.mxu0 %v2631
    %2706 = vmatprep.subr.bf16.mxu0 0
    %2707 = vmatpush1.bf16.msra.mxu0 %v2632
    %2708 = vmatprep.subr.bf16.mxu0 0
    %2709 = vmatpush1.bf16.msra.mxu0 %v2633
    %2710 = vmatprep.subr.bf16.mxu0 0
    %2711 = vmatpush1.bf16.msra.mxu0 %v2634
    %2712 = vmatprep.subr.bf16.mxu0 0
    %2713 = vmatpush1.bf16.msra.mxu0 %v2635
    %2714 = vmatprep.subr.bf16.mxu0 0
    %2715 = vmatpush1.bf16.msra.mxu0 %v2636
    %2716 = vmatprep.subr.bf16.mxu0 0
    %2717 = vmatpush1.bf16.msra.mxu0 %v2637
    %2718 = vmatprep.subr.bf16.mxu0 0
    %2719 = vmatpush1.bf16.msra.mxu0 0
    %2720 = vmatprep.subr.bf16.mxu0 0
    %2721 = vmatpush1.bf16.msra.mxu0 0
    %2722 = vmatprep.subr.bf16.mxu0 0
    %2723 = vmatpush1.bf16.msra.mxu0 0
    %2724 = vmatprep.subr.bf16.mxu0 0
    %2725 = vmatpush1.bf16.msra.mxu0 0
    %2726 = vmatprep.subr.bf16.mxu0 0
    %2727 = vmatpush1.bf16.msra.mxu0 0
    %2728 = vmatprep.subr.bf16.mxu0 0
    %2729 = vmatpush1.bf16.msra.mxu0 0
    %2730 = vmatprep.subr.bf16.mxu0 0
    %2731 = vmatpush1.bf16.msra.mxu0 0
    %2732 = vmatprep.subr.bf16.mxu0 0
    %2733 = vmatpush1.bf16.msra.mxu0 0
    %2734 = vmatprep.mubr.bf16.mxu0 0
    %2735 = vmatmul.mubr.bf16.gmra.mrb[0].mxu0 %v2194
    %v2736 = vpop.f32.mrb[0].mxu0
    %v2737 = vadd.f32 %v2697, %v2736
    %v2738 = vpop.f32.mrb[0].mxu0
    %v2739 = vpop.f32.mrb[0].mxu0
    %v2740 = vpop.f32.mrb[0].mxu0
    %2741 = vdwg.mxu0
    %v2742 = vld [vmem:[%s9] sm:$0x1]
    %v2744 = vlaneseq
    %v2745 = vshrl.u32 %v2744, 7
    %v2746 = vsub.s32 0, %v2745
    %v2747 = vrot.slane %v2742, %v2746
    %v2749 = vadd.f32 %v2737, %v2747
    %2750 = vst [vmem:[#allocation14] sm:$0xff] %v2749
    // Predicated region
    $region70: #{tpu_custom_call.1} parent=1 // pred_check
      _
    $region71: #{tpu_custom_call.1} parent=1 // pred_check_branch
      %2752 = sbr.rel (0) target = $region73
    $region72: #{tpu_custom_call.1} parent=1 // pred_region
      %s2754 = ssub.s32 128, 128
      %2755 = vsyncadd [#allocation4], %s2754
      %s2757 = sshll.u32 [#allocation14], 4
      %s2758 = int_to_ptr.vmem [resolvable:$true] %s2757
      %2760 = dma.vmem_to_hbm [thread:$0]  %s2758, 128, %s10, [#allocation4]
    $region73: #{tpu_custom_call.1} parent=1 // pred_fallthru
      _
    // Predicated region
    $region74: #{tpu_custom_call.1} parent=1 // pred_check
      _
    $region75: #{tpu_custom_call.1} parent=1 // pred_check_branch
      %2762 = sbr.rel (0) target = $region77
    $region76: #{tpu_custom_call.1} parent=1 // pred_region
      %2763 = dma.done [#allocation4], 128
    $region77: #{tpu_custom_call.1} parent=1 // pred_fallthru
      _
    %2764 = vsyncpa [#allocation3], 1
    %2765 = vsyncpa [#allocation6], 1
    %2766 = vsyncpa [#allocation9], 1
    %2767 = vsyncpa [#allocation12], 1
    %2768 = vsyncpa [#allocation4], 1

</llo_original>
